<compile_context>
chip_gen: v7x
topology: tpu7x:2x2x1
jax: 0.10.0
libtpu: 0.0.40
codegen_flags: <defaults>
</compile_context>

<pallas_src>
import jax
import jax.numpy as jnp
from jax.experimental import pallas as pl
from jax.experimental.pallas import tpu as pltpu

action_dim = 2
environment_dim = 20
robot_dim = 4
state_dim = environment_dim + robot_dim  # 24

H1 = 800          # logical hidden sizes (PyTorch)
H2 = 600

K_PAD = 128       # padded (lane-aligned) sizes used inside the kernel
H1_PAD = 896
H2_PAD = 640
OUT_PAD = 128

MAX_TILE_B = 1024  # f32 intermediates at 1024 rows ~= 6.3 MB, well in VMEM


def _round_up(x, m):
    return (x + m - 1) // m * m


def _choose_tile(batch):
    """Pick the batch tile (rows per grid step).

    * multiples of 16 (bf16 packs 16 sublanes/vreg),
    * >= 2 grid steps when the batch allows it (megacore sharding on v7x),
    * capped at MAX_TILE_B so per-step overhead is amortized without blowing
      up VMEM, and padding waste stays bounded for awkward batch sizes.
    """
    b16 = _round_up(batch, 16)
    if b16 <= 16:
        return b16
    tile = _round_up(pl.cdiv(b16, 2), 16)
    return min(tile, MAX_TILE_B)


def actor_kernel(s_ref, w1_ref, b1_ref, w2_ref, b2_ref, w3_ref, b3_ref, a_ref):
    # layer 1: (TB, 128)bf16 @ (128, 896)bf16 -> f32 acc, +bias, relu
    h1 = jnp.dot(s_ref[...], w1_ref[...], preferred_element_type=jnp.float32)
    h1 = jnp.maximum(h1 + b1_ref[...], 0.0)
    # layer 2: (TB, 896) @ (896, 640) -> f32 acc, +bias, relu
    h2 = jnp.dot(h1.astype(jnp.bfloat16), w2_ref[...],
                 preferred_element_type=jnp.float32)
    h2 = jnp.maximum(h2 + b2_ref[...], 0.0)
    # layer 3: (TB, 640) @ (640, 128) -> f32 acc, +bias, tanh, bf16 store
    h3 = jnp.dot(h2.astype(jnp.bfloat16), w3_ref[...],
                 preferred_element_type=jnp.float32)
    a_ref[...] = jnp.tanh(h3 + b3_ref[...]).astype(a_ref.dtype)


def init_params(key):
    """Deterministic synthetic params matching nn.Linear init/shapes.

    PyTorch stores Linear weight as (out, in); we build (out, in) then
    transpose once to (in, out) for the kernel. Biases kept 2D (1, out).
    """
    keys = jax.random.split(key, 6)

    def linear(kw, kb, fan_in, fan_out):
        bound = 1.0 / jnp.sqrt(fan_in)
        w = jax.random.uniform(kw, (fan_out, fan_in), jnp.float32, -bound, bound)
        b = jax.random.uniform(kb, (fan_out,), jnp.float32, -bound, bound)
        return w.T, b.reshape(1, fan_out)

    w1, b1 = linear(keys[0], keys[1], state_dim, H1)
    w2, b2 = linear(keys[2], keys[3], H1, H2)
    w3, b3 = linear(keys[4], keys[5], H2, action_dim)
    return {"w1": w1, "b1": b1, "w2": w2, "b2": b2, "w3": w3, "b3": b3}


def prepare_params(params):
    """One-time glue: zero-pad to vreg-aligned shapes, cast weights to bf16.

    Zero padding of both the extra rows and columns guarantees the padded
    lanes stay exactly zero through relu/tanh and cannot leak into real lanes.
    """
    def pad2(x, r, c):
        return jnp.pad(x, ((0, r - x.shape[0]), (0, c - x.shape[1])))

    w1 = pad2(params["w1"], K_PAD, H1_PAD).astype(jnp.bfloat16)
    w2 = pad2(params["w2"], H1_PAD, H2_PAD).astype(jnp.bfloat16)
    w3 = pad2(params["w3"], H2_PAD, OUT_PAD).astype(jnp.bfloat16)
    b1 = pad2(params["b1"], 1, H1_PAD)   # biases stay f32 (tiny)
    b2 = pad2(params["b2"], 1, H2_PAD)
    b3 = pad2(params["b3"], 1, OUT_PAD)
    return (w1, b1, w2, b2, w3, b3)


@jax.jit
def actor_forward(s, padded_params):
    """s: (B, state_dim) float32. padded_params: output of prepare_params."""
    w1, b1, w2, b2, w3, b3 = padded_params
    B = s.shape[0]

    tile_b = _choose_tile(B)
    b_pad = _round_up(B, tile_b)

    s_pad = jnp.pad(s.astype(jnp.bfloat16),
                    ((0, b_pad - B), (0, K_PAD - state_dim)))

    const = lambda i: (0, 0)           # weights/biases resident across grid
    row = lambda i: (i, 0)             # batch-tiled arrays

    flops = 2 * b_pad * (K_PAD * H1_PAD + H1_PAD * H2_PAD + H2_PAD * OUT_PAD)
    bytes_accessed = (
        s_pad.size * 2                                  # bf16 input
        + (w1.size + w2.size + w3.size) * 2             # bf16 weights
        + (b1.size + b2.size + b3.size) * 4             # f32 biases
        + b_pad * OUT_PAD * 2                           # bf16 output
    )

    out = pl.pallas_call(
        actor_kernel,
        out_shape=jax.ShapeDtypeStruct((b_pad, OUT_PAD), jnp.bfloat16),
        grid_spec=pltpu.PrefetchScalarGridSpec(
            num_scalar_prefetch=0,
            grid=(b_pad // tile_b,),
            in_specs=[
                pl.BlockSpec((tile_b, K_PAD), row),
                pl.BlockSpec((K_PAD, H1_PAD), const),
                pl.BlockSpec((1, H1_PAD), const),
                pl.BlockSpec((H1_PAD, H2_PAD), const),
                pl.BlockSpec((1, H2_PAD), const),
                pl.BlockSpec((H2_PAD, OUT_PAD), const),
                pl.BlockSpec((1, OUT_PAD), const),
            ],
            out_specs=pl.BlockSpec((tile_b, OUT_PAD), row),
        ),
        compiler_params=pltpu.CompilerParams(
            dimension_semantics=("parallel",),
        ),
        cost_estimate=pl.CostEstimate(
            flops=flops,
            transcendentals=b_pad * OUT_PAD,
            bytes_accessed=bytes_accessed,
        ),
    )(s_pad, w1, b1, w2, b2, w3, b3)

    # Slice the lane-dense padded output back to the real action dimension.
    return out[:B, :action_dim].astype(jnp.float32)


def actor_reference(s, params):
    """Pure-JAX reference mirroring the kernel's bf16-weight / f32-acc math."""
    w1 = params["w1"].astype(jnp.bfloat16)
    w2 = params["w2"].astype(jnp.bfloat16)
    w3 = params["w3"].astype(jnp.bfloat16)
    x = s.astype(jnp.bfloat16)
    h1 = jnp.maximum(
        jnp.dot(x, w1, preferred_element_type=jnp.float32) + params["b1"], 0.0)
    h2 = jnp.maximum(
        jnp.dot(h1.astype(jnp.bfloat16), w2,
                preferred_element_type=jnp.float32) + params["b2"], 0.0)
    h3 = jnp.dot(h2.astype(jnp.bfloat16), w3,
                 preferred_element_type=jnp.float32) + params["b3"]
    return jnp.tanh(h3)


if __name__ == "__main__":
    key = jax.random.PRNGKey(0)
    pkey, skey1, skey2 = jax.random.split(key, 3)
    params = init_params(pkey)
    padded_params = prepare_params(params)

    # Case 1: small rollout-style batch (single grid step).
    batch = 8
    s = jax.random.normal(skey1, (batch, state_dim), jnp.float32)
    a = actor_forward(s, padded_params)
    jax.block_until_ready(a)
    a_ref = actor_reference(s, params)
    assert a.shape == (batch, action_dim)
    # bf16 weights + bf16 output of tanh-bounded values: 2e-2 abs is a real
    # check (bf16 rounding near 1.0 is ~4e-3).
    assert jnp.allclose(a, a_ref, atol=2e-2, rtol=2e-2), float(
        jnp.max(jnp.abs(a - a_ref)))

    # Case 2: awkward moderate batch (multi-step grid, adaptive tile).
    batch2 = 300
    s2 = jax.random.normal(skey2, (batch2, state_dim), jnp.float32)
    a2 = actor_forward(s2, padded_params)
    jax.block_until_ready(a2)
    a2_ref = actor_reference(s2, params)
    assert a2.shape == (batch2, action_dim)
    assert jnp.allclose(a2, a2_ref, atol=2e-2, rtol=2e-2), float(
        jnp.max(jnp.abs(a2 - a2_ref)))

    print("KERNEL_OK")
</pallas_src>

<mosaic_0001>
module attributes {stable_mosaic.version = 11 : i64} {
  func.func @actor_kernel(%arg0: i32, %arg1: memref<16x128xbf16, #tpu.memory_space<vmem>>, %arg2: memref<128x896xbf16, #tpu.memory_space<vmem>>, %arg3: memref<1x896xf32, #tpu.memory_space<vmem>>, %arg4: memref<896x640xbf16, #tpu.memory_space<vmem>>, %arg5: memref<1x640xf32, #tpu.memory_space<vmem>>, %arg6: memref<640x128xbf16, #tpu.memory_space<vmem>>, %arg7: memref<1x128xf32, #tpu.memory_space<vmem>>, %arg8: memref<16x128xbf16, #tpu.memory_space<vmem>>) attributes {dimension_semantics = [#tpu.dimension_semantics<parallel>], iteration_bounds = array<i64: 1>, scalar_prefetch = 0 : i64, scratch_operands = 0 : i64, tpu.core_type = #tpu.core_type<tc>, window_params = [{transform_indices = @transform_0, window_bounds = array<i64: 16, 128>}, {pipeline_mode = #tpu.pipeline_mode<synchronous>, transform_indices = @transform_1, window_bounds = array<i64: 128, 896>}, {pipeline_mode = #tpu.pipeline_mode<synchronous>, transform_indices = @transform_2, window_bounds = array<i64: 1, 896>}, {pipeline_mode = #tpu.pipeline_mode<synchronous>, transform_indices = @transform_3, window_bounds = array<i64: 896, 640>}, {pipeline_mode = #tpu.pipeline_mode<synchronous>, transform_indices = @transform_4, window_bounds = array<i64: 1, 640>}, {pipeline_mode = #tpu.pipeline_mode<synchronous>, transform_indices = @transform_5, window_bounds = array<i64: 640, 128>}, {pipeline_mode = #tpu.pipeline_mode<synchronous>, transform_indices = @transform_6, window_bounds = array<i64: 1, 128>}, {transform_indices = @transform_7, window_bounds = array<i64: 16, 128>}]} {
    %c0 = arith.constant 0 : index
    %c0_0 = arith.constant 0 : index
    %0 = vector.load %arg1[%c0, %c0_0] : memref<16x128xbf16, #tpu.memory_space<vmem>>, vector<16x128xbf16>
    %c0_1 = arith.constant 0 : index
    %c0_2 = arith.constant 0 : index
    %1 = vector.load %arg2[%c0_1, %c0_2] : memref<128x896xbf16, #tpu.memory_space<vmem>>, vector<128x896xbf16>
    %cst = arith.constant dense<0.000000e+00> : vector<16x896xf32>
    %2 = tpu.matmul %0, %1, %cst {dimension_numbers = #tpu.dot_dimension_numbers<[1], [0], [0], [1], [0, 0, 1, 1], [], []>} : vector<16x128xbf16>, vector<128x896xbf16>, vector<16x896xf32> -> vector<16x896xf32>
    %c0_3 = arith.constant 0 : index
    %c0_4 = arith.constant 0 : index
    %3 = vector.load %arg3[%c0_3, %c0_4] : memref<1x896xf32, #tpu.memory_space<vmem>>, vector<1x896xf32>
    %4 = vector.broadcast %3 : vector<1x896xf32> to vector<16x896xf32>
    %5 = arith.addf %2, %4 : vector<16x896xf32>
    %cst_5 = arith.constant 0.000000e+00 : f32
    %6 = vector.broadcast %cst_5 : f32 to vector<16x896xf32>
    %7 = arith.maximumf %5, %6 : vector<16x896xf32>
    %8 = arith.truncf %7 : vector<16x896xf32> to vector<16x896xbf16>
    %c0_6 = arith.constant 0 : index
    %c0_7 = arith.constant 0 : index
    %9 = vector.load %arg4[%c0_6, %c0_7] : memref<896x640xbf16, #tpu.memory_space<vmem>>, vector<896x640xbf16>
    %cst_8 = arith.constant dense<0.000000e+00> : vector<16x640xf32>
    %10 = tpu.matmul %8, %9, %cst_8 {dimension_numbers = #tpu.dot_dimension_numbers<[1], [0], [0], [1], [0, 0, 1, 1], [], []>} : vector<16x896xbf16>, vector<896x640xbf16>, vector<16x640xf32> -> vector<16x640xf32>
    %c0_9 = arith.constant 0 : index
    %c0_10 = arith.constant 0 : index
    %11 = vector.load %arg5[%c0_9, %c0_10] : memref<1x640xf32, #tpu.memory_space<vmem>>, vector<1x640xf32>
    %12 = vector.broadcast %11 : vector<1x640xf32> to vector<16x640xf32>
    %13 = arith.addf %10, %12 : vector<16x640xf32>
    %cst_11 = arith.constant 0.000000e+00 : f32
    %14 = vector.broadcast %cst_11 : f32 to vector<16x640xf32>
    %15 = arith.maximumf %13, %14 : vector<16x640xf32>
    %16 = arith.truncf %15 : vector<16x640xf32> to vector<16x640xbf16>
    %c0_12 = arith.constant 0 : index
    %c0_13 = arith.constant 0 : index
    %17 = vector.load %arg6[%c0_12, %c0_13] : memref<640x128xbf16, #tpu.memory_space<vmem>>, vector<640x128xbf16>
    %cst_14 = arith.constant dense<0.000000e+00> : vector<16x128xf32>
    %18 = tpu.matmul %16, %17, %cst_14 {dimension_numbers = #tpu.dot_dimension_numbers<[1], [0], [0], [1], [0, 0, 1, 1], [], []>} : vector<16x640xbf16>, vector<640x128xbf16>, vector<16x128xf32> -> vector<16x128xf32>
    %c0_15 = arith.constant 0 : index
    %c0_16 = arith.constant 0 : index
    %19 = vector.load %arg7[%c0_15, %c0_16] : memref<1x128xf32, #tpu.memory_space<vmem>>, vector<1x128xf32>
    %20 = vector.broadcast %19 : vector<1x128xf32> to vector<16x128xf32>
    %21 = arith.addf %18, %20 : vector<16x128xf32>
    %22 = math.tanh %21 : vector<16x128xf32>
    %23 = arith.truncf %22 : vector<16x128xf32> to vector<16x128xbf16>
    %c0_17 = arith.constant 0 : index
    %c0_18 = arith.constant 0 : index
    %24 = vector.load %arg8[%c0_17, %c0_18] : memref<16x128xbf16, #tpu.memory_space<vmem>>, vector<16x128xbf16>
    tpu.vector_store %arg8[%c0_17, %c0_18], %23 {strides = array<i32>} : memref<16x128xbf16, #tpu.memory_space<vmem>>, vector<16x128xbf16>,
    return
  }
  func.func @transform_0(%arg0: i32) -> (i32, i32) {
    %c0_i32 = arith.constant 0 : i32
    %c0_i32_0 = arith.constant 0 : i32
    return %arg0, %c0_i32 : i32, i32
  }
  func.func @transform_1(%arg0: i32) -> (i32, i32) {
    %c0_i32 = arith.constant 0 : i32
    %c0_i32_0 = arith.constant 0 : i32
    %c0_i32_1 = arith.constant 0 : i32
    return %c0_i32, %c0_i32_0 : i32, i32
  }
  func.func @transform_2(%arg0: i32) -> (i32, i32) {
    %c0_i32 = arith.constant 0 : i32
    %c0_i32_0 = arith.constant 0 : i32
    %c0_i32_1 = arith.constant 0 : i32
    return %c0_i32, %c0_i32_0 : i32, i32
  }
  func.func @transform_3(%arg0: i32) -> (i32, i32) {
    %c0_i32 = arith.constant 0 : i32
    %c0_i32_0 = arith.constant 0 : i32
    %c0_i32_1 = arith.constant 0 : i32
    return %c0_i32, %c0_i32_0 : i32, i32
  }
  func.func @transform_4(%arg0: i32) -> (i32, i32) {
    %c0_i32 = arith.constant 0 : i32
    %c0_i32_0 = arith.constant 0 : i32
    %c0_i32_1 = arith.constant 0 : i32
    return %c0_i32, %c0_i32_0 : i32, i32
  }
  func.func @transform_5(%arg0: i32) -> (i32, i32) {
    %c0_i32 = arith.constant 0 : i32
    %c0_i32_0 = arith.constant 0 : i32
    %c0_i32_1 = arith.constant 0 : i32
    return %c0_i32, %c0_i32_0 : i32, i32
  }
  func.func @transform_6(%arg0: i32) -> (i32, i32) {
    %c0_i32 = arith.constant 0 : i32
    %c0_i32_0 = arith.constant 0 : i32
    %c0_i32_1 = arith.constant 0 : i32
    return %c0_i32, %c0_i32_0 : i32, i32
  }
  func.func @transform_7(%arg0: i32) -> (i32, i32) {
    %c0_i32 = arith.constant 0 : i32
    %c0_i32_0 = arith.constant 0 : i32
    return %arg0, %c0_i32 : i32, i32
  }
}

</mosaic_0001>

<llo_original>
// kernel: actor_forward.1
$region0: #{actor_forward.1}
  #allocation0 [shape = 'u32[]', space=smem, size = 0x4, offset = 0x4, fixed_abs, tag = 'smem constant byte address 0x4 - core index']
  #allocation1 [shape = 'u32[144,128]{1,0:T(1,128)}', space=vmem, size = 0x12000, scoped, tag = 'internal scratch']
  %s0 = inlined_call_operand.vmem [shape: bf16[16,128], index: 0, kind: input, shape index: {}]
  %s1 = inlined_call_operand.hbm [shape: bf16[128,896], index: 1, kind: input, shape index: {}]
  %s2 = inlined_call_operand.hbm [shape: f32[1,896], index: 2, kind: input, shape index: {}]
  %s3 = inlined_call_operand.hbm [shape: bf16[896,640], index: 3, kind: input, shape index: {}]
  %s4 = inlined_call_operand.hbm [shape: f32[1,640], index: 4, kind: input, shape index: {}]
  %s5 = inlined_call_operand.hbm [shape: bf16[640,128], index: 5, kind: input, shape index: {}]
  %s6 = inlined_call_operand.hbm [shape: f32[1,128], index: 6, kind: input, shape index: {}]
  %s7 = inlined_call_operand.vmem [shape: bf16[16,128], index: 7, kind: output, shape index: {}]
  %s8 = sld [smem:[#allocation0]]
  $region62: #{actor_forward.1} parent=0
    _
  %s10 = ssub.s32 1, %s8
  %s11 = scalar_select 0, %s10, %s8
  $region1: #{actor_forward.1} parent=0
    #allocation2 [shape = 'u8[229376]{0}', space=vmem, size = 0x38000, scoped, tag = 'input window, operand 1, single buffered']
    #allocation3 [shape = 's32[1]{0}', space=sflag, size = 0x4, scoped, tag = 'scoped memory for actor_forward.1']
    #allocation4 [shape = 'u8[3584]{0}', space=vmem, size = 0x1000, scoped, tag = 'input window, operand 2, single buffered']
    #allocation5 [shape = 's32[1]{0}', space=sflag, size = 0x4, scoped, tag = 'scoped memory for actor_forward.1']
    #allocation6 [shape = 'u8[1146880]{0}', space=vmem, size = 0x118000, scoped, tag = 'input window, operand 3, single buffered']
    #allocation7 [shape = 'u8[2560]{0}', space=vmem, size = 0xc00, scoped, tag = 'input window, operand 4, single buffered']
    #allocation8 [shape = 's32[1]{0}', space=sflag, size = 0x4, scoped, tag = 'scoped memory for actor_forward.1']
    #allocation9 [shape = 'u8[163840]{0}', space=vmem, size = 0x28000, scoped, tag = 'input window, operand 5, single buffered']
    #allocation10 [shape = 'u8[512]{0}', space=vmem, size = 0x400, scoped, tag = 'input window, operand 6, single buffered']
    #allocation11 [shape = 's32[1]{0}', space=sflag, size = 0x4, scoped, tag = 'scoped memory for actor_forward.1']
    %12 = vsyncpa [#allocation3], 0
    %13 = vsyncpa [#allocation5], 0
    %14 = vsyncpa [#allocation8], 0
    %15 = vsyncpa [#allocation11], 0
    // Predicated region
    $region2: #{actor_forward.1} parent=1 // pred_check
      _
    $region3: #{actor_forward.1} parent=1 // pred_check_branch
      %17 = sbr.rel (0) target = $region5
    $region4: #{actor_forward.1} parent=1 // pred_region
      _
    $region5: #{actor_forward.1} parent=1 // pred_fallthru
      _
    // Predicated region
    $region6: #{actor_forward.1} parent=1 // pred_check
      _
    $region7: #{actor_forward.1} parent=1 // pred_check_branch
      %19 = sbr.rel (0) target = $region9
    $region8: #{actor_forward.1} parent=1 // pred_region
      %s21 = ssub.s32 7168, 7168
      %22 = vsyncadd [#allocation3], %s21
      %s23 = sshll.u32 [#allocation2], 4
      %s24 = int_to_ptr.vmem [resolvable:$true] %s23
      %29 = dma.hbm_to_vmem [thread:$0]  %s1, 7168, %s24, [#allocation3], 448, 448, 28
    $region9: #{actor_forward.1} parent=1 // pred_fallthru
      _
    // Predicated region
    $region10: #{actor_forward.1} parent=1 // pred_check
      _
    $region11: #{actor_forward.1} parent=1 // pred_check_branch
      %31 = sbr.rel (0) target = $region13
    $region12: #{actor_forward.1} parent=1 // pred_region
      %s33 = ssub.s32 112, 112
      %34 = vsyncadd [#allocation5], %s33
      %s36 = sshll.u32 [#allocation4], 4
      %s37 = int_to_ptr.vmem [resolvable:$true] %s36
      %39 = dma.hbm_to_vmem [thread:$0]  %s2, 112, %s37, [#allocation5]
    $region13: #{actor_forward.1} parent=1 // pred_fallthru
      _
    // Predicated region
    $region14: #{actor_forward.1} parent=1 // pred_check
      _
    $region15: #{actor_forward.1} parent=1 // pred_check_branch
      %41 = sbr.rel (0) target = $region17
    $region16: #{actor_forward.1} parent=1 // pred_region
      %s43 = ssub.s32 35840, 35840
      %44 = vsyncadd [#allocation5], %s43
      %s45 = sshll.u32 [#allocation6], 4
      %s46 = int_to_ptr.vmem [resolvable:$true] %s45
      %51 = dma.hbm_to_vmem [thread:$0]  %s3, 35840, %s46, [#allocation5], 320, 320, 20
    $region17: #{actor_forward.1} parent=1 // pred_fallthru
      _
    // Predicated region
    $region18: #{actor_forward.1} parent=1 // pred_check
      _
    $region19: #{actor_forward.1} parent=1 // pred_check_branch
      %53 = sbr.rel (0) target = $region21
    $region20: #{actor_forward.1} parent=1 // pred_region
      %s55 = ssub.s32 80, 80
      %56 = vsyncadd [#allocation8], %s55
      %s58 = sshll.u32 [#allocation7], 4
      %s59 = int_to_ptr.vmem [resolvable:$true] %s58
      %61 = dma.hbm_to_vmem [thread:$0]  %s4, 80, %s59, [#allocation8]
    $region21: #{actor_forward.1} parent=1 // pred_fallthru
      _
    // Predicated region
    $region22: #{actor_forward.1} parent=1 // pred_check
      _
    $region23: #{actor_forward.1} parent=1 // pred_check_branch
      %63 = sbr.rel (0) target = $region25
    $region24: #{actor_forward.1} parent=1 // pred_region
      %s65 = ssub.s32 5120, 5120
      %66 = vsyncadd [#allocation8], %s65
      %s67 = sshll.u32 [#allocation9], 4
      %s68 = int_to_ptr.vmem [resolvable:$true] %s67
      %73 = dma.hbm_to_vmem [thread:$0]  %s5, 5120, %s68, [#allocation8], 64, 64, 4
    $region25: #{actor_forward.1} parent=1 // pred_fallthru
      _
    // Predicated region
    $region26: #{actor_forward.1} parent=1 // pred_check
      _
    $region27: #{actor_forward.1} parent=1 // pred_check_branch
      %75 = sbr.rel (0) target = $region29
    $region28: #{actor_forward.1} parent=1 // pred_region
      %s77 = ssub.s32 16, 16
      %78 = vsyncadd [#allocation11], %s77
      %s80 = sshll.u32 [#allocation10], 4
      %s81 = int_to_ptr.vmem [resolvable:$true] %s80
      %83 = dma.hbm_to_vmem [thread:$0]  %s6, 16, %s81, [#allocation11]
    $region29: #{actor_forward.1} parent=1 // pred_fallthru
      _
    // Predicated region
    $region30: #{actor_forward.1} parent=1 // pred_check
      _
    $region31: #{actor_forward.1} parent=1 // pred_check_branch
      %85 = sbr.rel (0) target = $region33
    $region32: #{actor_forward.1} parent=1 // pred_region
      %86 = dma.done [#allocation3], 7168
    $region33: #{actor_forward.1} parent=1 // pred_fallthru
      _
    // Predicated region
    $region34: #{actor_forward.1} parent=1 // pred_check
      _
    $region35: #{actor_forward.1} parent=1 // pred_check_branch
      %88 = sbr.rel (0) target = $region37
    $region36: #{actor_forward.1} parent=1 // pred_region
      %89 = dma.done [#allocation5], 112
    $region37: #{actor_forward.1} parent=1 // pred_fallthru
      _
    // Predicated region
    $region38: #{actor_forward.1} parent=1 // pred_check
      _
    $region39: #{actor_forward.1} parent=1 // pred_check_branch
      %91 = sbr.rel (0) target = $region41
    $region40: #{actor_forward.1} parent=1 // pred_region
      %92 = dma.done [#allocation5], 35840
    $region41: #{actor_forward.1} parent=1 // pred_fallthru
      _
    // Predicated region
    $region42: #{actor_forward.1} parent=1 // pred_check
      _
    $region43: #{actor_forward.1} parent=1 // pred_check_branch
      %94 = sbr.rel (0) target = $region45
    $region44: #{actor_forward.1} parent=1 // pred_region
      %95 = dma.done [#allocation8], 80
    $region45: #{actor_forward.1} parent=1 // pred_fallthru
      _
    // Predicated region
    $region46: #{actor_forward.1} parent=1 // pred_check
      _
    $region47: #{actor_forward.1} parent=1 // pred_check_branch
      %97 = sbr.rel (0) target = $region49
    $region48: #{actor_forward.1} parent=1 // pred_region
      %98 = dma.done [#allocation8], 5120
    $region49: #{actor_forward.1} parent=1 // pred_fallthru
      _
    // Predicated region
    $region50: #{actor_forward.1} parent=1 // pred_check
      _
    $region51: #{actor_forward.1} parent=1 // pred_check_branch
      %100 = sbr.rel (0) target = $region53
    $region52: #{actor_forward.1} parent=1 // pred_region
      %101 = dma.done [#allocation11], 16
    $region53: #{actor_forward.1} parent=1 // pred_fallthru
      _
    %v103 = vld [vmem:[%s0] sm:$0xf]
    %v104 = vld [vmem:[%s0 + $0x4] sm:$0xf]
    %v105 = vld [vmem:[#allocation2] sm:$0xff]
    %v106 = vld [vmem:[#allocation2 + $0x8] sm:$0xff]
    %v107 = vld [vmem:[#allocation2 + $0x10] sm:$0xff]
    %v108 = vld [vmem:[#allocation2 + $0x18] sm:$0xf]
    %v109 = vld [vmem:[#allocation2 + $0x1c] sm:$0xff]
    %v110 = vld [vmem:[#allocation2 + $0x24] sm:$0xff]
    %v111 = vld [vmem:[#allocation2 + $0x2c] sm:$0xff]
    %v112 = vld [vmem:[#allocation2 + $0x34] sm:$0xf]
    %v113 = vld [vmem:[#allocation2 + $0x38] sm:$0xff]
    %v114 = vld [vmem:[#allocation2 + $0x40] sm:$0xff]
    %v115 = vld [vmem:[#allocation2 + $0x48] sm:$0xff]
    %v116 = vld [vmem:[#allocation2 + $0x50] sm:$0xf]
    %v117 = vld [vmem:[#allocation2 + $0x54] sm:$0xff]
    %v118 = vld [vmem:[#allocation2 + $0x5c] sm:$0xff]
    %v119 = vld [vmem:[#allocation2 + $0x64] sm:$0xff]
    %v120 = vld [vmem:[#allocation2 + $0x6c] sm:$0xf]
    %v121 = vld [vmem:[#allocation2 + $0x70] sm:$0xff]
    %v122 = vld [vmem:[#allocation2 + $0x78] sm:$0xff]
    %v123 = vld [vmem:[#allocation2 + $0x80] sm:$0xff]
    %v124 = vld [vmem:[#allocation2 + $0x88] sm:$0xf]
    %v125 = vld [vmem:[#allocation2 + $0x8c] sm:$0xff]
    %v126 = vld [vmem:[#allocation2 + $0x94] sm:$0xff]
    %v127 = vld [vmem:[#allocation2 + $0x9c] sm:$0xff]
    %v128 = vld [vmem:[#allocation2 + $0xa4] sm:$0xf]
    %v129 = vld [vmem:[#allocation2 + $0xa8] sm:$0xff]
    %v130 = vld [vmem:[#allocation2 + $0xb0] sm:$0xff]
    %v131 = vld [vmem:[#allocation2 + $0xb8] sm:$0xff]
    %v132 = vld [vmem:[#allocation2 + $0xc0] sm:$0xf]
    %v133 = vld [vmem:[#allocation2 + $0xc4] sm:$0xff]
    %v134 = vld [vmem:[#allocation2 + $0xcc] sm:$0xff]
    %v135 = vld [vmem:[#allocation2 + $0xd4] sm:$0xff]
    %v136 = vld [vmem:[#allocation2 + $0xdc] sm:$0xf]
    %v137 = vld [vmem:[#allocation2 + $0xe0] sm:$0xff]
    %v138 = vld [vmem:[#allocation2 + $0xe8] sm:$0xff]
    %v139 = vld [vmem:[#allocation2 + $0xf0] sm:$0xff]
    %v140 = vld [vmem:[#allocation2 + $0xf8] sm:$0xf]
    %v141 = vld [vmem:[#allocation2 + $0xfc] sm:$0xff]
    %v142 = vld [vmem:[#allocation2 + $0x104] sm:$0xff]
    %v143 = vld [vmem:[#allocation2 + $0x10c] sm:$0xff]
    %v144 = vld [vmem:[#allocation2 + $0x114] sm:$0xf]
    %v145 = vld [vmem:[#allocation2 + $0x118] sm:$0xff]
    %v146 = vld [vmem:[#allocation2 + $0x120] sm:$0xff]
    %v147 = vld [vmem:[#allocation2 + $0x128] sm:$0xff]
    %v148 = vld [vmem:[#allocation2 + $0x130] sm:$0xf]
    %v149 = vld [vmem:[#allocation2 + $0x134] sm:$0xff]
    %v150 = vld [vmem:[#allocation2 + $0x13c] sm:$0xff]
    %v151 = vld [vmem:[#allocation2 + $0x144] sm:$0xff]
    %v152 = vld [vmem:[#allocation2 + $0x14c] sm:$0xf]
    %v153 = vld [vmem:[#allocation2 + $0x150] sm:$0xff]
    %v154 = vld [vmem:[#allocation2 + $0x158] sm:$0xff]
    %v155 = vld [vmem:[#allocation2 + $0x160] sm:$0xff]
    %v156 = vld [vmem:[#allocation2 + $0x168] sm:$0xf]
    %v157 = vld [vmem:[#allocation2 + $0x16c] sm:$0xff]
    %v158 = vld [vmem:[#allocation2 + $0x174] sm:$0xff]
    %v159 = vld [vmem:[#allocation2 + $0x17c] sm:$0xff]
    %v160 = vld [vmem:[#allocation2 + $0x184] sm:$0xf]
    %v161 = vld [vmem:[#allocation2 + $0x188] sm:$0xff]
    %v162 = vld [vmem:[#allocation2 + $0x190] sm:$0xff]
    %v163 = vld [vmem:[#allocation2 + $0x198] sm:$0xff]
    %v164 = vld [vmem:[#allocation2 + $0x1a0] sm:$0xf]
    %v165 = vld [vmem:[#allocation2 + $0x1a4] sm:$0xff]
    %v166 = vld [vmem:[#allocation2 + $0x1ac] sm:$0xff]
    %v167 = vld [vmem:[#allocation2 + $0x1b4] sm:$0xff]
    %v168 = vld [vmem:[#allocation2 + $0x1bc] sm:$0xf]
    %v169 = vld [vmem:[#allocation4] sm:$0xff]
    %v171 = vlaneseq
    %v172 = vshrl.u32 %v171, 7
    %v173 = vsub.s32 0, %v172
    %v174 = vrot.slane %v169, %v173
    %v175 = vlaneseq
    %v176 = vshrl.u32 %v175, 7
    %v177 = vsub.s32 1, %v176
    %v178 = vrot.slane %v169, %v177
    %v179 = vlaneseq
    %v180 = vshrl.u32 %v179, 7
    %v181 = vsub.s32 2, %v180
    %v182 = vrot.slane %v169, %v181
    %v183 = vlaneseq
    %v184 = vshrl.u32 %v183, 7
    %v185 = vsub.s32 3, %v184
    %v186 = vrot.slane %v169, %v185
    %v187 = vlaneseq
    %v188 = vshrl.u32 %v187, 7
    %v189 = vsub.s32 4, %v188
    %v190 = vrot.slane %v169, %v189
    %v191 = vlaneseq
    %v192 = vshrl.u32 %v191, 7
    %v193 = vsub.s32 5, %v192
    %v194 = vrot.slane %v169, %v193
    %v195 = vlaneseq
    %v196 = vshrl.u32 %v195, 7
    %v197 = vsub.s32 6, %v196
    %v198 = vrot.slane %v169, %v197
    %v208 = vunpack.c.l.b16 %v103
    %v209 = vunpack.c.l.b16 %v104
    %v210 = vpack.c.b16 %v209, %v208
    %v276 = vunpack.c.l.b16 %v105
    %v277 = vunpack.c.h.b16 %v105
    %v278 = vunpack.c.l.b16 %v106
    %v279 = vunpack.c.h.b16 %v106
    %v280 = vunpack.c.l.b16 %v107
    %v281 = vunpack.c.h.b16 %v107
    %v282 = vunpack.c.l.b16 %v108
    %v283 = vunpack.c.l.b16 %v109
    %v284 = vunpack.c.h.b16 %v109
    %v285 = vunpack.c.l.b16 %v110
    %v286 = vunpack.c.h.b16 %v110
    %v287 = vunpack.c.l.b16 %v111
    %v288 = vunpack.c.h.b16 %v111
    %v289 = vunpack.c.l.b16 %v112
    %v290 = vunpack.c.l.b16 %v113
    %v291 = vunpack.c.h.b16 %v113
    %v292 = vunpack.c.l.b16 %v114
    %v293 = vunpack.c.h.b16 %v114
    %v294 = vunpack.c.l.b16 %v115
    %v295 = vunpack.c.h.b16 %v115
    %v296 = vunpack.c.l.b16 %v116
    %v297 = vunpack.c.l.b16 %v117
    %v298 = vunpack.c.h.b16 %v117
    %v299 = vunpack.c.l.b16 %v118
    %v300 = vunpack.c.h.b16 %v118
    %v301 = vunpack.c.l.b16 %v119
    %v302 = vunpack.c.h.b16 %v119
    %v303 = vunpack.c.l.b16 %v120
    %v304 = vunpack.c.l.b16 %v121
    %v305 = vunpack.c.h.b16 %v121
    %v306 = vunpack.c.l.b16 %v122
    %v307 = vunpack.c.h.b16 %v122
    %v308 = vunpack.c.l.b16 %v123
    %v309 = vunpack.c.h.b16 %v123
    %v310 = vunpack.c.l.b16 %v124
    %v311 = vunpack.c.l.b16 %v125
    %v312 = vunpack.c.h.b16 %v125
    %v313 = vunpack.c.l.b16 %v126
    %v314 = vunpack.c.h.b16 %v126
    %v315 = vunpack.c.l.b16 %v127
    %v316 = vunpack.c.h.b16 %v127
    %v317 = vunpack.c.l.b16 %v128
    %v318 = vunpack.c.l.b16 %v129
    %v319 = vunpack.c.h.b16 %v129
    %v320 = vunpack.c.l.b16 %v130
    %v321 = vunpack.c.h.b16 %v130
    %v322 = vunpack.c.l.b16 %v131
    %v323 = vunpack.c.h.b16 %v131
    %v324 = vunpack.c.l.b16 %v132
    %v325 = vunpack.c.l.b16 %v133
    %v326 = vunpack.c.h.b16 %v133
    %v327 = vunpack.c.l.b16 %v134
    %v328 = vunpack.c.h.b16 %v134
    %v329 = vunpack.c.l.b16 %v135
    %v330 = vunpack.c.h.b16 %v135
    %v331 = vunpack.c.l.b16 %v136
    %v332 = vunpack.c.l.b16 %v137
    %v333 = vunpack.c.h.b16 %v137
    %v334 = vunpack.c.l.b16 %v138
    %v335 = vunpack.c.h.b16 %v138
    %v336 = vunpack.c.l.b16 %v139
    %v337 = vunpack.c.h.b16 %v139
    %v338 = vunpack.c.l.b16 %v140
    %v339 = vunpack.c.l.b16 %v141
    %v340 = vunpack.c.h.b16 %v141
    %v341 = vunpack.c.l.b16 %v142
    %v342 = vunpack.c.h.b16 %v142
    %v343 = vunpack.c.l.b16 %v143
    %v344 = vunpack.c.h.b16 %v143
    %v345 = vunpack.c.l.b16 %v144
    %v346 = vunpack.c.l.b16 %v145
    %v347 = vunpack.c.h.b16 %v145
    %v348 = vunpack.c.l.b16 %v146
    %v349 = vunpack.c.h.b16 %v146
    %v350 = vunpack.c.l.b16 %v147
    %v351 = vunpack.c.h.b16 %v147
    %v352 = vunpack.c.l.b16 %v148
    %v353 = vunpack.c.l.b16 %v149
    %v354 = vunpack.c.h.b16 %v149
    %v355 = vunpack.c.l.b16 %v150
    %v356 = vunpack.c.h.b16 %v150
    %v357 = vunpack.c.l.b16 %v151
    %v358 = vunpack.c.h.b16 %v151
    %v359 = vunpack.c.l.b16 %v152
    %v360 = vunpack.c.l.b16 %v153
    %v361 = vunpack.c.h.b16 %v153
    %v362 = vunpack.c.l.b16 %v154
    %v363 = vunpack.c.h.b16 %v154
    %v364 = vunpack.c.l.b16 %v155
    %v365 = vunpack.c.h.b16 %v155
    %v366 = vunpack.c.l.b16 %v156
    %v367 = vunpack.c.l.b16 %v157
    %v368 = vunpack.c.h.b16 %v157
    %v369 = vunpack.c.l.b16 %v158
    %v370 = vunpack.c.h.b16 %v158
    %v371 = vunpack.c.l.b16 %v159
    %v372 = vunpack.c.h.b16 %v159
    %v373 = vunpack.c.l.b16 %v160
    %v374 = vunpack.c.l.b16 %v161
    %v375 = vunpack.c.h.b16 %v161
    %v376 = vunpack.c.l.b16 %v162
    %v377 = vunpack.c.h.b16 %v162
    %v378 = vunpack.c.l.b16 %v163
    %v379 = vunpack.c.h.b16 %v163
    %v380 = vunpack.c.l.b16 %v164
    %v381 = vunpack.c.l.b16 %v165
    %v382 = vunpack.c.h.b16 %v165
    %v383 = vunpack.c.l.b16 %v166
    %v384 = vunpack.c.h.b16 %v166
    %v385 = vunpack.c.l.b16 %v167
    %v386 = vunpack.c.h.b16 %v167
    %v387 = vunpack.c.l.b16 %v168
    %v388 = vpack.c.b16 %v283, %v276
    %v389 = vpack.c.b16 %v284, %v277
    %v390 = vpack.c.b16 %v285, %v278
    %v391 = vpack.c.b16 %v286, %v279
    %v392 = vpack.c.b16 %v287, %v280
    %v393 = vpack.c.b16 %v288, %v281
    %v394 = vpack.c.b16 %v289, %v282
    %v395 = vpack.c.b16 %v297, %v290
    %v396 = vpack.c.b16 %v298, %v291
    %v397 = vpack.c.b16 %v299, %v292
    %v398 = vpack.c.b16 %v300, %v293
    %v399 = vpack.c.b16 %v301, %v294
    %v400 = vpack.c.b16 %v302, %v295
    %v401 = vpack.c.b16 %v303, %v296
    %v402 = vpack.c.b16 %v311, %v304
    %v403 = vpack.c.b16 %v312, %v305
    %v404 = vpack.c.b16 %v313, %v306
    %v405 = vpack.c.b16 %v314, %v307
    %v406 = vpack.c.b16 %v315, %v308
    %v407 = vpack.c.b16 %v316, %v309
    %v408 = vpack.c.b16 %v317, %v310
    %v409 = vpack.c.b16 %v325, %v318
    %v410 = vpack.c.b16 %v326, %v319
    %v411 = vpack.c.b16 %v327, %v320
    %v412 = vpack.c.b16 %v328, %v321
    %v413 = vpack.c.b16 %v329, %v322
    %v414 = vpack.c.b16 %v330, %v323
    %v415 = vpack.c.b16 %v331, %v324
    %v416 = vpack.c.b16 %v339, %v332
    %v417 = vpack.c.b16 %v340, %v333
    %v418 = vpack.c.b16 %v341, %v334
    %v419 = vpack.c.b16 %v342, %v335
    %v420 = vpack.c.b16 %v343, %v336
    %v421 = vpack.c.b16 %v344, %v337
    %v422 = vpack.c.b16 %v345, %v338
    %v423 = vpack.c.b16 %v353, %v346
    %v424 = vpack.c.b16 %v354, %v347
    %v425 = vpack.c.b16 %v355, %v348
    %v426 = vpack.c.b16 %v356, %v349
    %v427 = vpack.c.b16 %v357, %v350
    %v428 = vpack.c.b16 %v358, %v351
    %v429 = vpack.c.b16 %v359, %v352
    %v430 = vpack.c.b16 %v367, %v360
    %v431 = vpack.c.b16 %v368, %v361
    %v432 = vpack.c.b16 %v369, %v362
    %v433 = vpack.c.b16 %v370, %v363
    %v434 = vpack.c.b16 %v371, %v364
    %v435 = vpack.c.b16 %v372, %v365
    %v436 = vpack.c.b16 %v373, %v366
    %v437 = vpack.c.b16 %v381, %v374
    %v438 = vpack.c.b16 %v382, %v375
    %v439 = vpack.c.b16 %v383, %v376
    %v440 = vpack.c.b16 %v384, %v377
    %v441 = vpack.c.b16 %v385, %v378
    %v442 = vpack.c.b16 %v386, %v379
    %v443 = vpack.c.b16 %v387, %v380
    %500 = vmatprep.subr.bf16.mxu0 %v389
    %501 = vmatpush1.bf16.msra.mxu0 %v388
    %502 = vmatprep.subr.bf16.mxu0 %v396
    %503 = vmatpush1.bf16.msra.mxu0 %v395
    %504 = vmatprep.subr.bf16.mxu0 %v403
    %505 = vmatpush1.bf16.msra.mxu0 %v402
    %506 = vmatprep.subr.bf16.mxu0 %v410
    %507 = vmatpush1.bf16.msra.mxu0 %v409
    %508 = vmatprep.subr.bf16.mxu0 %v417
    %509 = vmatpush1.bf16.msra.mxu0 %v416
    %510 = vmatprep.subr.bf16.mxu0 %v424
    %511 = vmatpush1.bf16.msra.mxu0 %v423
    %512 = vmatprep.subr.bf16.mxu0 %v431
    %513 = vmatpush1.bf16.msra.mxu0 %v430
    %514 = vmatprep.subr.bf16.mxu0 %v438
    %515 = vmatpush1.bf16.msra.mxu0 %v437
    %516 = vmatprep.subr.bf16.mxu0 0
    %517 = vmatpush1.bf16.msra.mxu0 0
    %518 = vmatprep.subr.bf16.mxu0 0
    %519 = vmatpush1.bf16.msra.mxu0 0
    %520 = vmatprep.subr.bf16.mxu0 0
    %521 = vmatpush1.bf16.msra.mxu0 0
    %522 = vmatprep.subr.bf16.mxu0 0
    %523 = vmatpush1.bf16.msra.mxu0 0
    %524 = vmatprep.subr.bf16.mxu0 0
    %525 = vmatpush1.bf16.msra.mxu0 0
    %526 = vmatprep.subr.bf16.mxu0 0
    %527 = vmatpush1.bf16.msra.mxu0 0
    %528 = vmatprep.subr.bf16.mxu0 0
    %529 = vmatpush1.bf16.msra.mxu0 0
    %530 = vmatprep.subr.bf16.mxu0 0
    %531 = vmatpush1.bf16.msra.mxu0 0
    %532 = vmatprep.mubr.bf16.mxu0 0
    %533 = vmatmul.mubr.bf16.gmra.mrb[0].mxu0 %v210
    %v534 = vpop.f32.mrb[0].mxu0
    %v535 = vadd.f32 %v174, %v534
    %v536 = vpop.f32.mrb[0].mxu0
    %v537 = vadd.f32 %v178, %v536
    %v538 = vpop.f32.mrb[0].mxu0
    %v539 = vadd.f32 %v174, %v538
    %v540 = vpop.f32.mrb[0].mxu0
    %v541 = vadd.f32 %v178, %v540
    %542 = vdwg.mxu0
    %543 = vmatprep.subr.bf16.mxu0 %v391
    %544 = vmatpush1.bf16.msra.mxu0 %v390
    %545 = vmatprep.subr.bf16.mxu0 %v398
    %546 = vmatpush1.bf16.msra.mxu0 %v397
    %547 = vmatprep.subr.bf16.mxu0 %v405
    %548 = vmatpush1.bf16.msra.mxu0 %v404
    %549 = vmatprep.subr.bf16.mxu0 %v412
    %550 = vmatpush1.bf16.msra.mxu0 %v411
    %551 = vmatprep.subr.bf16.mxu0 %v419
    %552 = vmatpush1.bf16.msra.mxu0 %v418
    %553 = vmatprep.subr.bf16.mxu0 %v426
    %554 = vmatpush1.bf16.msra.mxu0 %v425
    %555 = vmatprep.subr.bf16.mxu0 %v433
    %556 = vmatpush1.bf16.msra.mxu0 %v432
    %557 = vmatprep.subr.bf16.mxu0 %v440
    %558 = vmatpush1.bf16.msra.mxu0 %v439
    %559 = vmatprep.subr.bf16.mxu0 0
    %560 = vmatpush1.bf16.msra.mxu0 0
    %561 = vmatprep.subr.bf16.mxu0 0
    %562 = vmatpush1.bf16.msra.mxu0 0
    %563 = vmatprep.subr.bf16.mxu0 0
    %564 = vmatpush1.bf16.msra.mxu0 0
    %565 = vmatprep.subr.bf16.mxu0 0
    %566 = vmatpush1.bf16.msra.mxu0 0
    %567 = vmatprep.subr.bf16.mxu0 0
    %568 = vmatpush1.bf16.msra.mxu0 0
    %569 = vmatprep.subr.bf16.mxu0 0
    %570 = vmatpush1.bf16.msra.mxu0 0
    %571 = vmatprep.subr.bf16.mxu0 0
    %572 = vmatpush1.bf16.msra.mxu0 0
    %573 = vmatprep.subr.bf16.mxu0 0
    %574 = vmatpush1.bf16.msra.mxu0 0
    %575 = vmatprep.mubr.bf16.mxu0 0
    %576 = vmatmul.mubr.bf16.gmra.mrb[0].mxu0 %v210
    %v577 = vpop.f32.mrb[0].mxu0
    %v578 = vadd.f32 %v182, %v577
    %v579 = vpop.f32.mrb[0].mxu0
    %v580 = vadd.f32 %v186, %v579
    %v581 = vpop.f32.mrb[0].mxu0
    %v582 = vadd.f32 %v182, %v581
    %v583 = vpop.f32.mrb[0].mxu0
    %v584 = vadd.f32 %v186, %v583
    %585 = vdwg.mxu0
    %586 = vmatprep.subr.bf16.mxu0 %v393
    %587 = vmatpush1.bf16.msra.mxu0 %v392
    %588 = vmatprep.subr.bf16.mxu0 %v400
    %589 = vmatpush1.bf16.msra.mxu0 %v399
    %590 = vmatprep.subr.bf16.mxu0 %v407
    %591 = vmatpush1.bf16.msra.mxu0 %v406
    %592 = vmatprep.subr.bf16.mxu0 %v414
    %593 = vmatpush1.bf16.msra.mxu0 %v413
    %594 = vmatprep.subr.bf16.mxu0 %v421
    %595 = vmatpush1.bf16.msra.mxu0 %v420
    %596 = vmatprep.subr.bf16.mxu0 %v428
    %597 = vmatpush1.bf16.msra.mxu0 %v427
    %598 = vmatprep.subr.bf16.mxu0 %v435
    %599 = vmatpush1.bf16.msra.mxu0 %v434
    %600 = vmatprep.subr.bf16.mxu0 %v442
    %601 = vmatpush1.bf16.msra.mxu0 %v441
    %602 = vmatprep.subr.bf16.mxu0 0
    %603 = vmatpush1.bf16.msra.mxu0 0
    %604 = vmatprep.subr.bf16.mxu0 0
    %605 = vmatpush1.bf16.msra.mxu0 0
    %606 = vmatprep.subr.bf16.mxu0 0
    %607 = vmatpush1.bf16.msra.mxu0 0
    %608 = vmatprep.subr.bf16.mxu0 0
    %609 = vmatpush1.bf16.msra.mxu0 0
    %610 = vmatprep.subr.bf16.mxu0 0
    %611 = vmatpush1.bf16.msra.mxu0 0
    %612 = vmatprep.subr.bf16.mxu0 0
    %613 = vmatpush1.bf16.msra.mxu0 0
    %614 = vmatprep.subr.bf16.mxu0 0
    %615 = vmatpush1.bf16.msra.mxu0 0
    %616 = vmatprep.subr.bf16.mxu0 0
    %617 = vmatpush1.bf16.msra.mxu0 0
    %618 = vmatprep.mubr.bf16.mxu0 0
    %619 = vmatmul.mubr.bf16.gmra.mrb[0].mxu0 %v210
    %v620 = vpop.f32.mrb[0].mxu0
    %v621 = vadd.f32 %v190, %v620
    %v622 = vpop.f32.mrb[0].mxu0
    %v623 = vadd.f32 %v194, %v622
    %v624 = vpop.f32.mrb[0].mxu0
    %v625 = vadd.f32 %v190, %v624
    %v626 = vpop.f32.mrb[0].mxu0
    %v627 = vadd.f32 %v194, %v626
    %628 = vdwg.mxu0
    %629 = vmatprep.subr.bf16.mxu0 0
    %630 = vmatpush1.bf16.msra.mxu0 %v394
    %631 = vmatprep.subr.bf16.mxu0 0
    %632 = vmatpush1.bf16.msra.mxu0 %v401
    %633 = vmatprep.subr.bf16.mxu0 0
    %634 = vmatpush1.bf16.msra.mxu0 %v408
    %635 = vmatprep.subr.bf16.mxu0 0
    %636 = vmatpush1.bf16.msra.mxu0 %v415
    %637 = vmatprep.subr.bf16.mxu0 0
    %638 = vmatpush1.bf16.msra.mxu0 %v422
    %639 = vmatprep.subr.bf16.mxu0 0
    %640 = vmatpush1.bf16.msra.mxu0 %v429
    %641 = vmatprep.subr.bf16.mxu0 0
    %642 = vmatpush1.bf16.msra.mxu0 %v436
    %643 = vmatprep.subr.bf16.mxu0 0
    %644 = vmatpush1.bf16.msra.mxu0 %v443
    %645 = vmatprep.subr.bf16.mxu0 0
    %646 = vmatpush1.bf16.msra.mxu0 0
    %647 = vmatprep.subr.bf16.mxu0 0
    %648 = vmatpush1.bf16.msra.mxu0 0
    %649 = vmatprep.subr.bf16.mxu0 0
    %650 = vmatpush1.bf16.msra.mxu0 0
    %651 = vmatprep.subr.bf16.mxu0 0
    %652 = vmatpush1.bf16.msra.mxu0 0
    %653 = vmatprep.subr.bf16.mxu0 0
    %654 = vmatpush1.bf16.msra.mxu0 0
    %655 = vmatprep.subr.bf16.mxu0 0
    %656 = vmatpush1.bf16.msra.mxu0 0
    %657 = vmatprep.subr.bf16.mxu0 0
    %658 = vmatpush1.bf16.msra.mxu0 0
    %659 = vmatprep.subr.bf16.mxu0 0
    %660 = vmatpush1.bf16.msra.mxu0 0
    %661 = vmatprep.mubr.bf16.mxu0 0
    %662 = vmatmul.mubr.bf16.gmra.mrb[0].mxu0 %v210
    %v663 = vpop.f32.mrb[0].mxu0
    %v664 = vadd.f32 %v198, %v663
    %v665 = vpop.f32.mrb[0].mxu0
    %v666 = vpop.f32.mrb[0].mxu0
    %v667 = vadd.f32 %v198, %v666
    %v668 = vpop.f32.mrb[0].mxu0
    %669 = vdwg.mxu0
    %v670 = vmax.f32 %v535, 0.0
    %v671 = vmax.f32 %v537, 0.0
    %v672 = vmax.f32 %v578, 0.0
    %v673 = vmax.f32 %v580, 0.0
    %v674 = vmax.f32 %v621, 0.0
    %v675 = vmax.f32 %v623, 0.0
    %v676 = vmax.f32 %v664, 0.0
    %v677 = vmax.f32 %v539, 0.0
    %v678 = vmax.f32 %v541, 0.0
    %v679 = vmax.f32 %v582, 0.0
    %v680 = vmax.f32 %v584, 0.0
    %v681 = vmax.f32 %v625, 0.0
    %v682 = vmax.f32 %v627, 0.0
    %v683 = vmax.f32 %v667, 0.0
    %v684 = vpack.c.bf16 %v677, %v670
    %v685 = vpack.c.bf16 %v678, %v671
    %v686 = vpack.c.bf16 %v679, %v672
    %v687 = vpack.c.bf16 %v680, %v673
    %v688 = vpack.c.bf16 %v681, %v674
    %v689 = vpack.c.bf16 %v682, %v675
    %v690 = vpack.c.bf16 %v683, %v676
    %v691 = vld [vmem:[#allocation6] sm:$0xff]
    %v692 = vld [vmem:[#allocation6 + $0x8] sm:$0xff]
    %v693 = vld [vmem:[#allocation6 + $0x10] sm:$0xf]
    %v694 = vld [vmem:[#allocation6 + $0x14] sm:$0xff]
    %v695 = vld [vmem:[#allocation6 + $0x1c] sm:$0xff]
    %v696 = vld [vmem:[#allocation6 + $0x24] sm:$0xf]
    %v697 = vld [vmem:[#allocation6 + $0x28] sm:$0xff]
    %v698 = vld [vmem:[#allocation6 + $0x30] sm:$0xff]
    %v699 = vld [vmem:[#allocation6 + $0x38] sm:$0xf]
    %v700 = vld [vmem:[#allocation6 + $0x3c] sm:$0xff]
    %v701 = vld [vmem:[#allocation6 + $0x44] sm:$0xff]
    %v702 = vld [vmem:[#allocation6 + $0x4c] sm:$0xf]
    %v703 = vld [vmem:[#allocation6 + $0x50] sm:$0xff]
    %v704 = vld [vmem:[#allocation6 + $0x58] sm:$0xff]
    %v705 = vld [vmem:[#allocation6 + $0x60] sm:$0xf]
    %v706 = vld [vmem:[#allocation6 + $0x64] sm:$0xff]
    %v707 = vld [vmem:[#allocation6 + $0x6c] sm:$0xff]
    %v708 = vld [vmem:[#allocation6 + $0x74] sm:$0xf]
    %v709 = vld [vmem:[#allocation6 + $0x78] sm:$0xff]
    %v710 = vld [vmem:[#allocation6 + $0x80] sm:$0xff]
    %v711 = vld [vmem:[#allocation6 + $0x88] sm:$0xf]
    %v712 = vld [vmem:[#allocation6 + $0x8c] sm:$0xff]
    %v713 = vld [vmem:[#allocation6 + $0x94] sm:$0xff]
    %v714 = vld [vmem:[#allocation6 + $0x9c] sm:$0xf]
    %v715 = vld [vmem:[#allocation6 + $0xa0] sm:$0xff]
    %v716 = vld [vmem:[#allocation6 + $0xa8] sm:$0xff]
    %v717 = vld [vmem:[#allocation6 + $0xb0] sm:$0xf]
    %v718 = vld [vmem:[#allocation6 + $0xb4] sm:$0xff]
    %v719 = vld [vmem:[#allocation6 + $0xbc] sm:$0xff]
    %v720 = vld [vmem:[#allocation6 + $0xc4] sm:$0xf]
    %v721 = vld [vmem:[#allocation6 + $0xc8] sm:$0xff]
    %v722 = vld [vmem:[#allocation6 + $0xd0] sm:$0xff]
    %v723 = vld [vmem:[#allocation6 + $0xd8] sm:$0xf]
    %v724 = vld [vmem:[#allocation6 + $0xdc] sm:$0xff]
    %v725 = vld [vmem:[#allocation6 + $0xe4] sm:$0xff]
    %v726 = vld [vmem:[#allocation6 + $0xec] sm:$0xf]
    %v727 = vld [vmem:[#allocation6 + $0xf0] sm:$0xff]
    %v728 = vld [vmem:[#allocation6 + $0xf8] sm:$0xff]
    %v729 = vld [vmem:[#allocation6 + $0x100] sm:$0xf]
    %v730 = vld [vmem:[#allocation6 + $0x104] sm:$0xff]
    %v731 = vld [vmem:[#allocation6 + $0x10c] sm:$0xff]
    %v732 = vld [vmem:[#allocation6 + $0x114] sm:$0xf]
    %v733 = vld [vmem:[#allocation6 + $0x118] sm:$0xff]
    %v734 = vld [vmem:[#allocation6 + $0x120] sm:$0xff]
    %v735 = vld [vmem:[#allocation6 + $0x128] sm:$0xf]
    %v736 = vld [vmem:[#allocation6 + $0x12c] sm:$0xff]
    %v737 = vld [vmem:[#allocation6 + $0x134] sm:$0xff]
    %v738 = vld [vmem:[#allocation6 + $0x13c] sm:$0xf]
    %v739 = vld [vmem:[#allocation6 + $0x140] sm:$0xff]
    %v740 = vld [vmem:[#allocation6 + $0x148] sm:$0xff]
    %v741 = vld [vmem:[#allocation6 + $0x150] sm:$0xf]
    %v742 = vld [vmem:[#allocation6 + $0x154] sm:$0xff]
    %v743 = vld [vmem:[#allocation6 + $0x15c] sm:$0xff]
    %v744 = vld [vmem:[#allocation6 + $0x164] sm:$0xf]
    %v745 = vld [vmem:[#allocation6 + $0x168] sm:$0xff]
    %v746 = vld [vmem:[#allocation6 + $0x170] sm:$0xff]
    %v747 = vld [vmem:[#allocation6 + $0x178] sm:$0xf]
    %v748 = vld [vmem:[#allocation6 + $0x17c] sm:$0xff]
    %v749 = vld [vmem:[#allocation6 + $0x184] sm:$0xff]
    %v750 = vld [vmem:[#allocation6 + $0x18c] sm:$0xf]
    %v751 = vld [vmem:[#allocation6 + $0x190] sm:$0xff]
    %v752 = vld [vmem:[#allocation6 + $0x198] sm:$0xff]
    %v753 = vld [vmem:[#allocation6 + $0x1a0] sm:$0xf]
    %v754 = vld [vmem:[#allocation6 + $0x1a4] sm:$0xff]
    %v755 = vld [vmem:[#allocation6 + $0x1ac] sm:$0xff]
    %v756 = vld [vmem:[#allocation6 + $0x1b4] sm:$0xf]
    %v757 = vld [vmem:[#allocation6 + $0x1b8] sm:$0xff]
    %v758 = vld [vmem:[#allocation6 + $0x1c0] sm:$0xff]
    %v759 = vld [vmem:[#allocation6 + $0x1c8] sm:$0xf]
    %v760 = vld [vmem:[#allocation6 + $0x1cc] sm:$0xff]
    %v761 = vld [vmem:[#allocation6 + $0x1d4] sm:$0xff]
    %v762 = vld [vmem:[#allocation6 + $0x1dc] sm:$0xf]
    %v763 = vld [vmem:[#allocation6 + $0x1e0] sm:$0xff]
    %v764 = vld [vmem:[#allocation6 + $0x1e8] sm:$0xff]
    %v765 = vld [vmem:[#allocation6 + $0x1f0] sm:$0xf]
    %v766 = vld [vmem:[#allocation6 + $0x1f4] sm:$0xff]
    %v767 = vld [vmem:[#allocation6 + $0x1fc] sm:$0xff]
    %v768 = vld [vmem:[#allocation6 + $0x204] sm:$0xf]
    %v769 = vld [vmem:[#allocation6 + $0x208] sm:$0xff]
    %v770 = vld [vmem:[#allocation6 + $0x210] sm:$0xff]
    %v771 = vld [vmem:[#allocation6 + $0x218] sm:$0xf]
    %v772 = vld [vmem:[#allocation6 + $0x21c] sm:$0xff]
    %v773 = vld [vmem:[#allocation6 + $0x224] sm:$0xff]
    %v774 = vld [vmem:[#allocation6 + $0x22c] sm:$0xf]
    %v775 = vld [vmem:[#allocation6 + $0x230] sm:$0xff]
    %v776 = vld [vmem:[#allocation6 + $0x238] sm:$0xff]
    %v777 = vld [vmem:[#allocation6 + $0x240] sm:$0xf]
    %v778 = vld [vmem:[#allocation6 + $0x244] sm:$0xff]
    %v779 = vld [vmem:[#allocation6 + $0x24c] sm:$0xff]
    %v780 = vld [vmem:[#allocation6 + $0x254] sm:$0xf]
    %v781 = vld [vmem:[#allocation6 + $0x258] sm:$0xff]
    %v782 = vld [vmem:[#allocation6 + $0x260] sm:$0xff]
    %v783 = vld [vmem:[#allocation6 + $0x268] sm:$0xf]
    %v784 = vld [vmem:[#allocation6 + $0x26c] sm:$0xff]
    %v785 = vld [vmem:[#allocation6 + $0x274] sm:$0xff]
    %v786 = vld [vmem:[#allocation6 + $0x27c] sm:$0xf]
    %v787 = vld [vmem:[#allocation6 + $0x280] sm:$0xff]
    %v788 = vld [vmem:[#allocation6 + $0x288] sm:$0xff]
    %v789 = vld [vmem:[#allocation6 + $0x290] sm:$0xf]
    %v790 = vld [vmem:[#allocation6 + $0x294] sm:$0xff]
    %v791 = vld [vmem:[#allocation6 + $0x29c] sm:$0xff]
    %v792 = vld [vmem:[#allocation6 + $0x2a4] sm:$0xf]
    %v793 = vld [vmem:[#allocation6 + $0x2a8] sm:$0xff]
    %v794 = vld [vmem:[#allocation6 + $0x2b0] sm:$0xff]
    %v795 = vld [vmem:[#allocation6 + $0x2b8] sm:$0xf]
    %v796 = vld [vmem:[#allocation6 + $0x2bc] sm:$0xff]
    %v797 = vld [vmem:[#allocation6 + $0x2c4] sm:$0xff]
    %v798 = vld [vmem:[#allocation6 + $0x2cc] sm:$0xf]
    %v799 = vld [vmem:[#allocation6 + $0x2d0] sm:$0xff]
    %v800 = vld [vmem:[#allocation6 + $0x2d8] sm:$0xff]
    %v801 = vld [vmem:[#allocation6 + $0x2e0] sm:$0xf]
    %v802 = vld [vmem:[#allocation6 + $0x2e4] sm:$0xff]
    %v803 = vld [vmem:[#allocation6 + $0x2ec] sm:$0xff]
    %v804 = vld [vmem:[#allocation6 + $0x2f4] sm:$0xf]
    %v805 = vld [vmem:[#allocation6 + $0x2f8] sm:$0xff]
    %v806 = vld [vmem:[#allocation6 + $0x300] sm:$0xff]
    %v807 = vld [vmem:[#allocation6 + $0x308] sm:$0xf]
    %v808 = vld [vmem:[#allocation6 + $0x30c] sm:$0xff]
    %v809 = vld [vmem:[#allocation6 + $0x314] sm:$0xff]
    %v810 = vld [vmem:[#allocation6 + $0x31c] sm:$0xf]
    %v811 = vld [vmem:[#allocation6 + $0x320] sm:$0xff]
    %v812 = vld [vmem:[#allocation6 + $0x328] sm:$0xff]
    %v813 = vld [vmem:[#allocation6 + $0x330] sm:$0xf]
    %v814 = vld [vmem:[#allocation6 + $0x334] sm:$0xff]
    %v815 = vld [vmem:[#allocation6 + $0x33c] sm:$0xff]
    %v816 = vld [vmem:[#allocation6 + $0x344] sm:$0xf]
    %v817 = vld [vmem:[#allocation6 + $0x348] sm:$0xff]
    %v818 = vld [vmem:[#allocation6 + $0x350] sm:$0xff]
    %v819 = vld [vmem:[#allocation6 + $0x358] sm:$0xf]
    %v820 = vld [vmem:[#allocation6 + $0x35c] sm:$0xff]
    %v821 = vld [vmem:[#allocation6 + $0x364] sm:$0xff]
    %v822 = vld [vmem:[#allocation6 + $0x36c] sm:$0xf]
    %v823 = vld [vmem:[#allocation6 + $0x370] sm:$0xff]
    %v824 = vld [vmem:[#allocation6 + $0x378] sm:$0xff]
    %v825 = vld [vmem:[#allocation6 + $0x380] sm:$0xf]
    %v826 = vld [vmem:[#allocation6 + $0x384] sm:$0xff]
    %v827 = vld [vmem:[#allocation6 + $0x38c] sm:$0xff]
    %v828 = vld [vmem:[#allocation6 + $0x394] sm:$0xf]
    %v829 = vld [vmem:[#allocation6 + $0x398] sm:$0xff]
    %v830 = vld [vmem:[#allocation6 + $0x3a0] sm:$0xff]
    %v831 = vld [vmem:[#allocation6 + $0x3a8] sm:$0xf]
    %v832 = vld [vmem:[#allocation6 + $0x3ac] sm:$0xff]
    %v833 = vld [vmem:[#allocation6 + $0x3b4] sm:$0xff]
    %v834 = vld [vmem:[#allocation6 + $0x3bc] sm:$0xf]
    %v835 = vld [vmem:[#allocation6 + $0x3c0] sm:$0xff]
    %v836 = vld [vmem:[#allocation6 + $0x3c8] sm:$0xff]
    %v837 = vld [vmem:[#allocation6 + $0x3d0] sm:$0xf]
    %v838 = vld [vmem:[#allocation6 + $0x3d4] sm:$0xff]
    %v839 = vld [vmem:[#allocation6 + $0x3dc] sm:$0xff]
    %v840 = vld [vmem:[#allocation6 + $0x3e4] sm:$0xf]
    %v841 = vld [vmem:[#allocation6 + $0x3e8] sm:$0xff]
    %v842 = vld [vmem:[#allocation6 + $0x3f0] sm:$0xff]
    %v843 = vld [vmem:[#allocation6 + $0x3f8] sm:$0xf]
    %v844 = vld [vmem:[#allocation6 + $0x3fc] sm:$0xff]
    %v845 = vld [vmem:[#allocation6 + $0x404] sm:$0xff]
    %v846 = vld [vmem:[#allocation6 + $0x40c] sm:$0xf]
    %v847 = vld [vmem:[#allocation6 + $0x410] sm:$0xff]
    %v848 = vld [vmem:[#allocation6 + $0x418] sm:$0xff]
    %v849 = vld [vmem:[#allocation6 + $0x420] sm:$0xf]
    %v850 = vld [vmem:[#allocation6 + $0x424] sm:$0xff]
    %v851 = vld [vmem:[#allocation6 + $0x42c] sm:$0xff]
    %v852 = vld [vmem:[#allocation6 + $0x434] sm:$0xf]
    %v853 = vld [vmem:[#allocation6 + $0x438] sm:$0xff]
    %v854 = vld [vmem:[#allocation6 + $0x440] sm:$0xff]
    %v855 = vld [vmem:[#allocation6 + $0x448] sm:$0xf]
    %v856 = vld [vmem:[#allocation6 + $0x44c] sm:$0xff]
    %v857 = vld [vmem:[#allocation6 + $0x454] sm:$0xff]
    %v858 = vld [vmem:[#allocation6 + $0x45c] sm:$0xf]
    %v859 = vld [vmem:[#allocation6 + $0x460] sm:$0xff]
    %v860 = vld [vmem:[#allocation6 + $0x468] sm:$0xff]
    %v861 = vld [vmem:[#allocation6 + $0x470] sm:$0xf]
    %v862 = vld [vmem:[#allocation6 + $0x474] sm:$0xff]
    %v863 = vld [vmem:[#allocation6 + $0x47c] sm:$0xff]
    %v864 = vld [vmem:[#allocation6 + $0x484] sm:$0xf]
    %v865 = vld [vmem:[#allocation6 + $0x488] sm:$0xff]
    %v866 = vld [vmem:[#allocation6 + $0x490] sm:$0xff]
    %v867 = vld [vmem:[#allocation6 + $0x498] sm:$0xf]
    %v868 = vld [vmem:[#allocation6 + $0x49c] sm:$0xff]
    %v869 = vld [vmem:[#allocation6 + $0x4a4] sm:$0xff]
    %v870 = vld [vmem:[#allocation6 + $0x4ac] sm:$0xf]
    %v871 = vld [vmem:[#allocation6 + $0x4b0] sm:$0xff]
    %v872 = vld [vmem:[#allocation6 + $0x4b8] sm:$0xff]
    %v873 = vld [vmem:[#allocation6 + $0x4c0] sm:$0xf]
    %v874 = vld [vmem:[#allocation6 + $0x4c4] sm:$0xff]
    %v875 = vld [vmem:[#allocation6 + $0x4cc] sm:$0xff]
    %v876 = vld [vmem:[#allocation6 + $0x4d4] sm:$0xf]
    %v877 = vld [vmem:[#allocation6 + $0x4d8] sm:$0xff]
    %v878 = vld [vmem:[#allocation6 + $0x4e0] sm:$0xff]
    %v879 = vld [vmem:[#allocation6 + $0x4e8] sm:$0xf]
    %v880 = vld [vmem:[#allocation6 + $0x4ec] sm:$0xff]
    %v881 = vld [vmem:[#allocation6 + $0x4f4] sm:$0xff]
    %v882 = vld [vmem:[#allocation6 + $0x4fc] sm:$0xf]
    %v883 = vld [vmem:[#allocation6 + $0x500] sm:$0xff]
    %v884 = vld [vmem:[#allocation6 + $0x508] sm:$0xff]
    %v885 = vld [vmem:[#allocation6 + $0x510] sm:$0xf]
    %v886 = vld [vmem:[#allocation6 + $0x514] sm:$0xff]
    %v887 = vld [vmem:[#allocation6 + $0x51c] sm:$0xff]
    %v888 = vld [vmem:[#allocation6 + $0x524] sm:$0xf]
    %v889 = vld [vmem:[#allocation6 + $0x528] sm:$0xff]
    %v890 = vld [vmem:[#allocation6 + $0x530] sm:$0xff]
    %v891 = vld [vmem:[#allocation6 + $0x538] sm:$0xf]
    %v892 = vld [vmem:[#allocation6 + $0x53c] sm:$0xff]
    %v893 = vld [vmem:[#allocation6 + $0x544] sm:$0xff]
    %v894 = vld [vmem:[#allocation6 + $0x54c] sm:$0xf]
    %v895 = vld [vmem:[#allocation6 + $0x550] sm:$0xff]
    %v896 = vld [vmem:[#allocation6 + $0x558] sm:$0xff]
    %v897 = vld [vmem:[#allocation6 + $0x560] sm:$0xf]
    %v898 = vld [vmem:[#allocation6 + $0x564] sm:$0xff]
    %v899 = vld [vmem:[#allocation6 + $0x56c] sm:$0xff]
    %v900 = vld [vmem:[#allocation6 + $0x574] sm:$0xf]
    %v901 = vld [vmem:[#allocation6 + $0x578] sm:$0xff]
    %v902 = vld [vmem:[#allocation6 + $0x580] sm:$0xff]
    %v903 = vld [vmem:[#allocation6 + $0x588] sm:$0xf]
    %v904 = vld [vmem:[#allocation6 + $0x58c] sm:$0xff]
    %v905 = vld [vmem:[#allocation6 + $0x594] sm:$0xff]
    %v906 = vld [vmem:[#allocation6 + $0x59c] sm:$0xf]
    %v907 = vld [vmem:[#allocation6 + $0x5a0] sm:$0xff]
    %v908 = vld [vmem:[#allocation6 + $0x5a8] sm:$0xff]
    %v909 = vld [vmem:[#allocation6 + $0x5b0] sm:$0xf]
    %v910 = vld [vmem:[#allocation6 + $0x5b4] sm:$0xff]
    %v911 = vld [vmem:[#allocation6 + $0x5bc] sm:$0xff]
    %v912 = vld [vmem:[#allocation6 + $0x5c4] sm:$0xf]
    %v913 = vld [vmem:[#allocation6 + $0x5c8] sm:$0xff]
    %v914 = vld [vmem:[#allocation6 + $0x5d0] sm:$0xff]
    %v915 = vld [vmem:[#allocation6 + $0x5d8] sm:$0xf]
    %v916 = vld [vmem:[#allocation6 + $0x5dc] sm:$0xff]
    %v917 = vld [vmem:[#allocation6 + $0x5e4] sm:$0xff]
    %v918 = vld [vmem:[#allocation6 + $0x5ec] sm:$0xf]
    %v919 = vld [vmem:[#allocation6 + $0x5f0] sm:$0xff]
    %v920 = vld [vmem:[#allocation6 + $0x5f8] sm:$0xff]
    %v921 = vld [vmem:[#allocation6 + $0x600] sm:$0xf]
    %v922 = vld [vmem:[#allocation6 + $0x604] sm:$0xff]
    %v923 = vld [vmem:[#allocation6 + $0x60c] sm:$0xff]
    %v924 = vld [vmem:[#allocation6 + $0x614] sm:$0xf]
    %v925 = vld [vmem:[#allocation6 + $0x618] sm:$0xff]
    %v926 = vld [vmem:[#allocation6 + $0x620] sm:$0xff]
    %v927 = vld [vmem:[#allocation6 + $0x628] sm:$0xf]
    %v928 = vld [vmem:[#allocation6 + $0x62c] sm:$0xff]
    %v929 = vld [vmem:[#allocation6 + $0x634] sm:$0xff]
    %v930 = vld [vmem:[#allocation6 + $0x63c] sm:$0xf]
    %v931 = vld [vmem:[#allocation6 + $0x640] sm:$0xff]
    %v932 = vld [vmem:[#allocation6 + $0x648] sm:$0xff]
    %v933 = vld [vmem:[#allocation6 + $0x650] sm:$0xf]
    %v934 = vld [vmem:[#allocation6 + $0x654] sm:$0xff]
    %v935 = vld [vmem:[#allocation6 + $0x65c] sm:$0xff]
    %v936 = vld [vmem:[#allocation6 + $0x664] sm:$0xf]
    %v937 = vld [vmem:[#allocation6 + $0x668] sm:$0xff]
    %v938 = vld [vmem:[#allocation6 + $0x670] sm:$0xff]
    %v939 = vld [vmem:[#allocation6 + $0x678] sm:$0xf]
    %v940 = vld [vmem:[#allocation6 + $0x67c] sm:$0xff]
    %v941 = vld [vmem:[#allocation6 + $0x684] sm:$0xff]
    %v942 = vld [vmem:[#allocation6 + $0x68c] sm:$0xf]
    %v943 = vld [vmem:[#allocation6 + $0x690] sm:$0xff]
    %v944 = vld [vmem:[#allocation6 + $0x698] sm:$0xff]
    %v945 = vld [vmem:[#allocation6 + $0x6a0] sm:$0xf]
    %v946 = vld [vmem:[#allocation6 + $0x6a4] sm:$0xff]
    %v947 = vld [vmem:[#allocation6 + $0x6ac] sm:$0xff]
    %v948 = vld [vmem:[#allocation6 + $0x6b4] sm:$0xf]
    %v949 = vld [vmem:[#allocation6 + $0x6b8] sm:$0xff]
    %v950 = vld [vmem:[#allocation6 + $0x6c0] sm:$0xff]
    %v951 = vld [vmem:[#allocation6 + $0x6c8] sm:$0xf]
    %v952 = vld [vmem:[#allocation6 + $0x6cc] sm:$0xff]
    %v953 = vld [vmem:[#allocation6 + $0x6d4] sm:$0xff]
    %v954 = vld [vmem:[#allocation6 + $0x6dc] sm:$0xf]
    %v955 = vld [vmem:[#allocation6 + $0x6e0] sm:$0xff]
    %v956 = vld [vmem:[#allocation6 + $0x6e8] sm:$0xff]
    %v957 = vld [vmem:[#allocation6 + $0x6f0] sm:$0xf]
    %v958 = vld [vmem:[#allocation6 + $0x6f4] sm:$0xff]
    %v959 = vld [vmem:[#allocation6 + $0x6fc] sm:$0xff]
    %v960 = vld [vmem:[#allocation6 + $0x704] sm:$0xf]
    %v961 = vld [vmem:[#allocation6 + $0x708] sm:$0xff]
    %v962 = vld [vmem:[#allocation6 + $0x710] sm:$0xff]
    %v963 = vld [vmem:[#allocation6 + $0x718] sm:$0xf]
    %v964 = vld [vmem:[#allocation6 + $0x71c] sm:$0xff]
    %v965 = vld [vmem:[#allocation6 + $0x724] sm:$0xff]
    %v966 = vld [vmem:[#allocation6 + $0x72c] sm:$0xf]
    %v967 = vld [vmem:[#allocation6 + $0x730] sm:$0xff]
    %v968 = vld [vmem:[#allocation6 + $0x738] sm:$0xff]
    %v969 = vld [vmem:[#allocation6 + $0x740] sm:$0xf]
    %v970 = vld [vmem:[#allocation6 + $0x744] sm:$0xff]
    %v971 = vld [vmem:[#allocation6 + $0x74c] sm:$0xff]
    %v972 = vld [vmem:[#allocation6 + $0x754] sm:$0xf]
    %v973 = vld [vmem:[#allocation6 + $0x758] sm:$0xff]
    %v974 = vld [vmem:[#allocation6 + $0x760] sm:$0xff]
    %v975 = vld [vmem:[#allocation6 + $0x768] sm:$0xf]
    %v976 = vld [vmem:[#allocation6 + $0x76c] sm:$0xff]
    %v977 = vld [vmem:[#allocation6 + $0x774] sm:$0xff]
    %v978 = vld [vmem:[#allocation6 + $0x77c] sm:$0xf]
    %v979 = vld [vmem:[#allocation6 + $0x780] sm:$0xff]
    %v980 = vld [vmem:[#allocation6 + $0x788] sm:$0xff]
    %v981 = vld [vmem:[#allocation6 + $0x790] sm:$0xf]
    %v982 = vld [vmem:[#allocation6 + $0x794] sm:$0xff]
    %v983 = vld [vmem:[#allocation6 + $0x79c] sm:$0xff]
    %v984 = vld [vmem:[#allocation6 + $0x7a4] sm:$0xf]
    %v985 = vld [vmem:[#allocation6 + $0x7a8] sm:$0xff]
    %v986 = vld [vmem:[#allocation6 + $0x7b0] sm:$0xff]
    %v987 = vld [vmem:[#allocation6 + $0x7b8] sm:$0xf]
    %v988 = vld [vmem:[#allocation6 + $0x7bc] sm:$0xff]
    %v989 = vld [vmem:[#allocation6 + $0x7c4] sm:$0xff]
    %v990 = vld [vmem:[#allocation6 + $0x7cc] sm:$0xf]
    %v991 = vld [vmem:[#allocation6 + $0x7d0] sm:$0xff]
    %v992 = vld [vmem:[#allocation6 + $0x7d8] sm:$0xff]
    %v993 = vld [vmem:[#allocation6 + $0x7e0] sm:$0xf]
    %v994 = vld [vmem:[#allocation6 + $0x7e4] sm:$0xff]
    %v995 = vld [vmem:[#allocation6 + $0x7ec] sm:$0xff]
    %v996 = vld [vmem:[#allocation6 + $0x7f4] sm:$0xf]
    %v997 = vld [vmem:[#allocation6 + $0x7f8] sm:$0xff]
    %v998 = vld [vmem:[#allocation6 + $0x800] sm:$0xff]
    %v999 = vld [vmem:[#allocation6 + $0x808] sm:$0xf]
    %v1000 = vld [vmem:[#allocation6 + $0x80c] sm:$0xff]
    %v1001 = vld [vmem:[#allocation6 + $0x814] sm:$0xff]
    %v1002 = vld [vmem:[#allocation6 + $0x81c] sm:$0xf]
    %v1003 = vld [vmem:[#allocation6 + $0x820] sm:$0xff]
    %v1004 = vld [vmem:[#allocation6 + $0x828] sm:$0xff]
    %v1005 = vld [vmem:[#allocation6 + $0x830] sm:$0xf]
    %v1006 = vld [vmem:[#allocation6 + $0x834] sm:$0xff]
    %v1007 = vld [vmem:[#allocation6 + $0x83c] sm:$0xff]
    %v1008 = vld [vmem:[#allocation6 + $0x844] sm:$0xf]
    %v1009 = vld [vmem:[#allocation6 + $0x848] sm:$0xff]
    %v1010 = vld [vmem:[#allocation6 + $0x850] sm:$0xff]
    %v1011 = vld [vmem:[#allocation6 + $0x858] sm:$0xf]
    %v1012 = vld [vmem:[#allocation6 + $0x85c] sm:$0xff]
    %v1013 = vld [vmem:[#allocation6 + $0x864] sm:$0xff]
    %v1014 = vld [vmem:[#allocation6 + $0x86c] sm:$0xf]
    %v1015 = vld [vmem:[#allocation6 + $0x870] sm:$0xff]
    %v1016 = vld [vmem:[#allocation6 + $0x878] sm:$0xff]
    %v1017 = vld [vmem:[#allocation6 + $0x880] sm:$0xf]
    %v1018 = vld [vmem:[#allocation6 + $0x884] sm:$0xff]
    %v1019 = vld [vmem:[#allocation6 + $0x88c] sm:$0xff]
    %v1020 = vld [vmem:[#allocation6 + $0x894] sm:$0xf]
    %v1021 = vld [vmem:[#allocation6 + $0x898] sm:$0xff]
    %v1022 = vld [vmem:[#allocation6 + $0x8a0] sm:$0xff]
    %v1023 = vld [vmem:[#allocation6 + $0x8a8] sm:$0xf]
    %v1024 = vld [vmem:[#allocation6 + $0x8ac] sm:$0xff]
    %v1025 = vld [vmem:[#allocation6 + $0x8b4] sm:$0xff]
    %v1026 = vld [vmem:[#allocation6 + $0x8bc] sm:$0xf]
    %v1027 = vld [vmem:[#allocation7] sm:$0x1f]
    %v1029 = vlaneseq
    %v1030 = vshrl.u32 %v1029, 7
    %v1031 = vsub.s32 0, %v1030
    %v1032 = vrot.slane %v1027, %v1031
    %v1033 = vlaneseq
    %v1034 = vshrl.u32 %v1033, 7
    %v1035 = vsub.s32 1, %v1034
    %v1036 = vrot.slane %v1027, %v1035
    %v1037 = vlaneseq
    %v1038 = vshrl.u32 %v1037, 7
    %v1039 = vsub.s32 2, %v1038
    %v1040 = vrot.slane %v1027, %v1039
    %v1041 = vlaneseq
    %v1042 = vshrl.u32 %v1041, 7
    %v1043 = vsub.s32 3, %v1042
    %v1044 = vrot.slane %v1027, %v1043
    %v1045 = vlaneseq
    %v1046 = vshrl.u32 %v1045, 7
    %v1047 = vsub.s32 4, %v1046
    %v1048 = vrot.slane %v1027, %v1047
    %v1390 = vunpack.c.l.b16 %v691
    %v1391 = vunpack.c.h.b16 %v691
    %v1392 = vunpack.c.l.b16 %v692
    %v1393 = vunpack.c.h.b16 %v692
    %v1394 = vunpack.c.l.b16 %v693
    %v1395 = vunpack.c.l.b16 %v694
    %v1396 = vunpack.c.h.b16 %v694
    %v1397 = vunpack.c.l.b16 %v695
    %v1398 = vunpack.c.h.b16 %v695
    %v1399 = vunpack.c.l.b16 %v696
    %v1400 = vunpack.c.l.b16 %v697
    %v1401 = vunpack.c.h.b16 %v697
    %v1402 = vunpack.c.l.b16 %v698
    %v1403 = vunpack.c.h.b16 %v698
    %v1404 = vunpack.c.l.b16 %v699
    %v1405 = vunpack.c.l.b16 %v700
    %v1406 = vunpack.c.h.b16 %v700
    %v1407 = vunpack.c.l.b16 %v701
    %v1408 = vunpack.c.h.b16 %v701
    %v1409 = vunpack.c.l.b16 %v702
    %v1410 = vunpack.c.l.b16 %v703
    %v1411 = vunpack.c.h.b16 %v703
    %v1412 = vunpack.c.l.b16 %v704
    %v1413 = vunpack.c.h.b16 %v704
    %v1414 = vunpack.c.l.b16 %v705
    %v1415 = vunpack.c.l.b16 %v706
    %v1416 = vunpack.c.h.b16 %v706
    %v1417 = vunpack.c.l.b16 %v707
    %v1418 = vunpack.c.h.b16 %v707
    %v1419 = vunpack.c.l.b16 %v708
    %v1420 = vunpack.c.l.b16 %v709
    %v1421 = vunpack.c.h.b16 %v709
    %v1422 = vunpack.c.l.b16 %v710
    %v1423 = vunpack.c.h.b16 %v710
    %v1424 = vunpack.c.l.b16 %v711
    %v1425 = vunpack.c.l.b16 %v712
    %v1426 = vunpack.c.h.b16 %v712
    %v1427 = vunpack.c.l.b16 %v713
    %v1428 = vunpack.c.h.b16 %v713
    %v1429 = vunpack.c.l.b16 %v714
    %v1430 = vunpack.c.l.b16 %v715
    %v1431 = vunpack.c.h.b16 %v715
    %v1432 = vunpack.c.l.b16 %v716
    %v1433 = vunpack.c.h.b16 %v716
    %v1434 = vunpack.c.l.b16 %v717
    %v1435 = vunpack.c.l.b16 %v718
    %v1436 = vunpack.c.h.b16 %v718
    %v1437 = vunpack.c.l.b16 %v719
    %v1438 = vunpack.c.h.b16 %v719
    %v1439 = vunpack.c.l.b16 %v720
    %v1440 = vunpack.c.l.b16 %v721
    %v1441 = vunpack.c.h.b16 %v721
    %v1442 = vunpack.c.l.b16 %v722
    %v1443 = vunpack.c.h.b16 %v722
    %v1444 = vunpack.c.l.b16 %v723
    %v1445 = vunpack.c.l.b16 %v724
    %v1446 = vunpack.c.h.b16 %v724
    %v1447 = vunpack.c.l.b16 %v725
    %v1448 = vunpack.c.h.b16 %v725
    %v1449 = vunpack.c.l.b16 %v726
    %v1450 = vunpack.c.l.b16 %v727
    %v1451 = vunpack.c.h.b16 %v727
    %v1452 = vunpack.c.l.b16 %v728
    %v1453 = vunpack.c.h.b16 %v728
    %v1454 = vunpack.c.l.b16 %v729
    %v1455 = vunpack.c.l.b16 %v730
    %v1456 = vunpack.c.h.b16 %v730
    %v1457 = vunpack.c.l.b16 %v731
    %v1458 = vunpack.c.h.b16 %v731
    %v1459 = vunpack.c.l.b16 %v732
    %v1460 = vunpack.c.l.b16 %v733
    %v1461 = vunpack.c.h.b16 %v733
    %v1462 = vunpack.c.l.b16 %v734
    %v1463 = vunpack.c.h.b16 %v734
    %v1464 = vunpack.c.l.b16 %v735
    %v1465 = vunpack.c.l.b16 %v736
    %v1466 = vunpack.c.h.b16 %v736
    %v1467 = vunpack.c.l.b16 %v737
    %v1468 = vunpack.c.h.b16 %v737
    %v1469 = vunpack.c.l.b16 %v738
    %v1470 = vunpack.c.l.b16 %v739
    %v1471 = vunpack.c.h.b16 %v739
    %v1472 = vunpack.c.l.b16 %v740
    %v1473 = vunpack.c.h.b16 %v740
    %v1474 = vunpack.c.l.b16 %v741
    %v1475 = vunpack.c.l.b16 %v742
    %v1476 = vunpack.c.h.b16 %v742
    %v1477 = vunpack.c.l.b16 %v743
    %v1478 = vunpack.c.h.b16 %v743
    %v1479 = vunpack.c.l.b16 %v744
    %v1480 = vunpack.c.l.b16 %v745
    %v1481 = vunpack.c.h.b16 %v745
    %v1482 = vunpack.c.l.b16 %v746
    %v1483 = vunpack.c.h.b16 %v746
    %v1484 = vunpack.c.l.b16 %v747
    %v1485 = vunpack.c.l.b16 %v748
    %v1486 = vunpack.c.h.b16 %v748
    %v1487 = vunpack.c.l.b16 %v749
    %v1488 = vunpack.c.h.b16 %v749
    %v1489 = vunpack.c.l.b16 %v750
    %v1490 = vunpack.c.l.b16 %v751
    %v1491 = vunpack.c.h.b16 %v751
    %v1492 = vunpack.c.l.b16 %v752
    %v1493 = vunpack.c.h.b16 %v752
    %v1494 = vunpack.c.l.b16 %v753
    %v1495 = vunpack.c.l.b16 %v754
    %v1496 = vunpack.c.h.b16 %v754
    %v1497 = vunpack.c.l.b16 %v755
    %v1498 = vunpack.c.h.b16 %v755
    %v1499 = vunpack.c.l.b16 %v756
    %v1500 = vunpack.c.l.b16 %v757
    %v1501 = vunpack.c.h.b16 %v757
    %v1502 = vunpack.c.l.b16 %v758
    %v1503 = vunpack.c.h.b16 %v758
    %v1504 = vunpack.c.l.b16 %v759
    %v1505 = vunpack.c.l.b16 %v760
    %v1506 = vunpack.c.h.b16 %v760
    %v1507 = vunpack.c.l.b16 %v761
    %v1508 = vunpack.c.h.b16 %v761
    %v1509 = vunpack.c.l.b16 %v762
    %v1510 = vunpack.c.l.b16 %v763
    %v1511 = vunpack.c.h.b16 %v763
    %v1512 = vunpack.c.l.b16 %v764
    %v1513 = vunpack.c.h.b16 %v764
    %v1514 = vunpack.c.l.b16 %v765
    %v1515 = vunpack.c.l.b16 %v766
    %v1516 = vunpack.c.h.b16 %v766
    %v1517 = vunpack.c.l.b16 %v767
    %v1518 = vunpack.c.h.b16 %v767
    %v1519 = vunpack.c.l.b16 %v768
    %v1520 = vunpack.c.l.b16 %v769
    %v1521 = vunpack.c.h.b16 %v769
    %v1522 = vunpack.c.l.b16 %v770
    %v1523 = vunpack.c.h.b16 %v770
    %v1524 = vunpack.c.l.b16 %v771
    %v1525 = vunpack.c.l.b16 %v772
    %v1526 = vunpack.c.h.b16 %v772
    %v1527 = vunpack.c.l.b16 %v773
    %v1528 = vunpack.c.h.b16 %v773
    %v1529 = vunpack.c.l.b16 %v774
    %v1530 = vunpack.c.l.b16 %v775
    %v1531 = vunpack.c.h.b16 %v775
    %v1532 = vunpack.c.l.b16 %v776
    %v1533 = vunpack.c.h.b16 %v776
    %v1534 = vunpack.c.l.b16 %v777
    %v1535 = vunpack.c.l.b16 %v778
    %v1536 = vunpack.c.h.b16 %v778
    %v1537 = vunpack.c.l.b16 %v779
    %v1538 = vunpack.c.h.b16 %v779
    %v1539 = vunpack.c.l.b16 %v780
    %v1540 = vunpack.c.l.b16 %v781
    %v1541 = vunpack.c.h.b16 %v781
    %v1542 = vunpack.c.l.b16 %v782
    %v1543 = vunpack.c.h.b16 %v782
    %v1544 = vunpack.c.l.b16 %v783
    %v1545 = vunpack.c.l.b16 %v784
    %v1546 = vunpack.c.h.b16 %v784
    %v1547 = vunpack.c.l.b16 %v785
    %v1548 = vunpack.c.h.b16 %v785
    %v1549 = vunpack.c.l.b16 %v786
    %v1550 = vunpack.c.l.b16 %v787
    %v1551 = vunpack.c.h.b16 %v787
    %v1552 = vunpack.c.l.b16 %v788
    %v1553 = vunpack.c.h.b16 %v788
    %v1554 = vunpack.c.l.b16 %v789
    %v1555 = vunpack.c.l.b16 %v790
    %v1556 = vunpack.c.h.b16 %v790
    %v1557 = vunpack.c.l.b16 %v791
    %v1558 = vunpack.c.h.b16 %v791
    %v1559 = vunpack.c.l.b16 %v792
    %v1560 = vunpack.c.l.b16 %v793
    %v1561 = vunpack.c.h.b16 %v793
    %v1562 = vunpack.c.l.b16 %v794
    %v1563 = vunpack.c.h.b16 %v794
    %v1564 = vunpack.c.l.b16 %v795
    %v1565 = vunpack.c.l.b16 %v796
    %v1566 = vunpack.c.h.b16 %v796
    %v1567 = vunpack.c.l.b16 %v797
    %v1568 = vunpack.c.h.b16 %v797
    %v1569 = vunpack.c.l.b16 %v798
    %v1570 = vunpack.c.l.b16 %v799
    %v1571 = vunpack.c.h.b16 %v799
    %v1572 = vunpack.c.l.b16 %v800
    %v1573 = vunpack.c.h.b16 %v800
    %v1574 = vunpack.c.l.b16 %v801
    %v1575 = vunpack.c.l.b16 %v802
    %v1576 = vunpack.c.h.b16 %v802
    %v1577 = vunpack.c.l.b16 %v803
    %v1578 = vunpack.c.h.b16 %v803
    %v1579 = vunpack.c.l.b16 %v804
    %v1580 = vunpack.c.l.b16 %v805
    %v1581 = vunpack.c.h.b16 %v805
    %v1582 = vunpack.c.l.b16 %v806
    %v1583 = vunpack.c.h.b16 %v806
    %v1584 = vunpack.c.l.b16 %v807
    %v1585 = vunpack.c.l.b16 %v808
    %v1586 = vunpack.c.h.b16 %v808
    %v1587 = vunpack.c.l.b16 %v809
    %v1588 = vunpack.c.h.b16 %v809
    %v1589 = vunpack.c.l.b16 %v810
    %v1590 = vunpack.c.l.b16 %v811
    %v1591 = vunpack.c.h.b16 %v811
    %v1592 = vunpack.c.l.b16 %v812
    %v1593 = vunpack.c.h.b16 %v812
    %v1594 = vunpack.c.l.b16 %v813
    %v1595 = vunpack.c.l.b16 %v814
    %v1596 = vunpack.c.h.b16 %v814
    %v1597 = vunpack.c.l.b16 %v815
    %v1598 = vunpack.c.h.b16 %v815
    %v1599 = vunpack.c.l.b16 %v816
    %v1600 = vunpack.c.l.b16 %v817
    %v1601 = vunpack.c.h.b16 %v817
    %v1602 = vunpack.c.l.b16 %v818
    %v1603 = vunpack.c.h.b16 %v818
    %v1604 = vunpack.c.l.b16 %v819
    %v1605 = vunpack.c.l.b16 %v820
    %v1606 = vunpack.c.h.b16 %v820
    %v1607 = vunpack.c.l.b16 %v821
    %v1608 = vunpack.c.h.b16 %v821
    %v1609 = vunpack.c.l.b16 %v822
    %v1610 = vunpack.c.l.b16 %v823
    %v1611 = vunpack.c.h.b16 %v823
    %v1612 = vunpack.c.l.b16 %v824
    %v1613 = vunpack.c.h.b16 %v824
    %v1614 = vunpack.c.l.b16 %v825
    %v1615 = vunpack.c.l.b16 %v826
    %v1616 = vunpack.c.h.b16 %v826
    %v1617 = vunpack.c.l.b16 %v827
    %v1618 = vunpack.c.h.b16 %v827
    %v1619 = vunpack.c.l.b16 %v828
    %v1620 = vunpack.c.l.b16 %v829
    %v1621 = vunpack.c.h.b16 %v829
    %v1622 = vunpack.c.l.b16 %v830
    %v1623 = vunpack.c.h.b16 %v830
    %v1624 = vunpack.c.l.b16 %v831
    %v1625 = vunpack.c.l.b16 %v832
    %v1626 = vunpack.c.h.b16 %v832
    %v1627 = vunpack.c.l.b16 %v833
    %v1628 = vunpack.c.h.b16 %v833
    %v1629 = vunpack.c.l.b16 %v834
    %v1630 = vunpack.c.l.b16 %v835
    %v1631 = vunpack.c.h.b16 %v835
    %v1632 = vunpack.c.l.b16 %v836
    %v1633 = vunpack.c.h.b16 %v836
    %v1634 = vunpack.c.l.b16 %v837
    %v1635 = vunpack.c.l.b16 %v838
    %v1636 = vunpack.c.h.b16 %v838
    %v1637 = vunpack.c.l.b16 %v839
    %v1638 = vunpack.c.h.b16 %v839
    %v1639 = vunpack.c.l.b16 %v840
    %v1640 = vunpack.c.l.b16 %v841
    %v1641 = vunpack.c.h.b16 %v841
    %v1642 = vunpack.c.l.b16 %v842
    %v1643 = vunpack.c.h.b16 %v842
    %v1644 = vunpack.c.l.b16 %v843
    %v1645 = vunpack.c.l.b16 %v844
    %v1646 = vunpack.c.h.b16 %v844
    %v1647 = vunpack.c.l.b16 %v845
    %v1648 = vunpack.c.h.b16 %v845
    %v1649 = vunpack.c.l.b16 %v846
    %v1650 = vunpack.c.l.b16 %v847
    %v1651 = vunpack.c.h.b16 %v847
    %v1652 = vunpack.c.l.b16 %v848
    %v1653 = vunpack.c.h.b16 %v848
    %v1654 = vunpack.c.l.b16 %v849
    %v1655 = vunpack.c.l.b16 %v850
    %v1656 = vunpack.c.h.b16 %v850
    %v1657 = vunpack.c.l.b16 %v851
    %v1658 = vunpack.c.h.b16 %v851
    %v1659 = vunpack.c.l.b16 %v852
    %v1660 = vunpack.c.l.b16 %v853
    %v1661 = vunpack.c.h.b16 %v853
    %v1662 = vunpack.c.l.b16 %v854
    %v1663 = vunpack.c.h.b16 %v854
    %v1664 = vunpack.c.l.b16 %v855
    %v1665 = vunpack.c.l.b16 %v856
    %v1666 = vunpack.c.h.b16 %v856
    %v1667 = vunpack.c.l.b16 %v857
    %v1668 = vunpack.c.h.b16 %v857
    %v1669 = vunpack.c.l.b16 %v858
    %v1670 = vunpack.c.l.b16 %v859
    %v1671 = vunpack.c.h.b16 %v859
    %v1672 = vunpack.c.l.b16 %v860
    %v1673 = vunpack.c.h.b16 %v860
    %v1674 = vunpack.c.l.b16 %v861
    %v1675 = vunpack.c.l.b16 %v862
    %v1676 = vunpack.c.h.b16 %v862
    %v1677 = vunpack.c.l.b16 %v863
    %v1678 = vunpack.c.h.b16 %v863
    %v1679 = vunpack.c.l.b16 %v864
    %v1680 = vunpack.c.l.b16 %v865
    %v1681 = vunpack.c.h.b16 %v865
    %v1682 = vunpack.c.l.b16 %v866
    %v1683 = vunpack.c.h.b16 %v866
    %v1684 = vunpack.c.l.b16 %v867
    %v1685 = vunpack.c.l.b16 %v868
    %v1686 = vunpack.c.h.b16 %v868
    %v1687 = vunpack.c.l.b16 %v869
    %v1688 = vunpack.c.h.b16 %v869
    %v1689 = vunpack.c.l.b16 %v870
    %v1690 = vunpack.c.l.b16 %v871
    %v1691 = vunpack.c.h.b16 %v871
    %v1692 = vunpack.c.l.b16 %v872
    %v1693 = vunpack.c.h.b16 %v872
    %v1694 = vunpack.c.l.b16 %v873
    %v1695 = vunpack.c.l.b16 %v874
    %v1696 = vunpack.c.h.b16 %v874
    %v1697 = vunpack.c.l.b16 %v875
    %v1698 = vunpack.c.h.b16 %v875
    %v1699 = vunpack.c.l.b16 %v876
    %v1700 = vunpack.c.l.b16 %v877
    %v1701 = vunpack.c.h.b16 %v877
    %v1702 = vunpack.c.l.b16 %v878
    %v1703 = vunpack.c.h.b16 %v878
    %v1704 = vunpack.c.l.b16 %v879
    %v1705 = vunpack.c.l.b16 %v880
    %v1706 = vunpack.c.h.b16 %v880
    %v1707 = vunpack.c.l.b16 %v881
    %v1708 = vunpack.c.h.b16 %v881
    %v1709 = vunpack.c.l.b16 %v882
    %v1710 = vunpack.c.l.b16 %v883
    %v1711 = vunpack.c.h.b16 %v883
    %v1712 = vunpack.c.l.b16 %v884
    %v1713 = vunpack.c.h.b16 %v884
    %v1714 = vunpack.c.l.b16 %v885
    %v1715 = vunpack.c.l.b16 %v886
    %v1716 = vunpack.c.h.b16 %v886
    %v1717 = vunpack.c.l.b16 %v887
    %v1718 = vunpack.c.h.b16 %v887
    %v1719 = vunpack.c.l.b16 %v888
    %v1720 = vunpack.c.l.b16 %v889
    %v1721 = vunpack.c.h.b16 %v889
    %v1722 = vunpack.c.l.b16 %v890
    %v1723 = vunpack.c.h.b16 %v890
    %v1724 = vunpack.c.l.b16 %v891
    %v1725 = vunpack.c.l.b16 %v892
    %v1726 = vunpack.c.h.b16 %v892
    %v1727 = vunpack.c.l.b16 %v893
    %v1728 = vunpack.c.h.b16 %v893
    %v1729 = vunpack.c.l.b16 %v894
    %v1730 = vunpack.c.l.b16 %v895
    %v1731 = vunpack.c.h.b16 %v895
    %v1732 = vunpack.c.l.b16 %v896
    %v1733 = vunpack.c.h.b16 %v896
    %v1734 = vunpack.c.l.b16 %v897
    %v1735 = vunpack.c.l.b16 %v898
    %v1736 = vunpack.c.h.b16 %v898
    %v1737 = vunpack.c.l.b16 %v899
    %v1738 = vunpack.c.h.b16 %v899
    %v1739 = vunpack.c.l.b16 %v900
    %v1740 = vunpack.c.l.b16 %v901
    %v1741 = vunpack.c.h.b16 %v901
    %v1742 = vunpack.c.l.b16 %v902
    %v1743 = vunpack.c.h.b16 %v902
    %v1744 = vunpack.c.l.b16 %v903
    %v1745 = vunpack.c.l.b16 %v904
    %v1746 = vunpack.c.h.b16 %v904
    %v1747 = vunpack.c.l.b16 %v905
    %v1748 = vunpack.c.h.b16 %v905
    %v1749 = vunpack.c.l.b16 %v906
    %v1750 = vunpack.c.l.b16 %v907
    %v1751 = vunpack.c.h.b16 %v907
    %v1752 = vunpack.c.l.b16 %v908
    %v1753 = vunpack.c.h.b16 %v908
    %v1754 = vunpack.c.l.b16 %v909
    %v1755 = vunpack.c.l.b16 %v910
    %v1756 = vunpack.c.h.b16 %v910
    %v1757 = vunpack.c.l.b16 %v911
    %v1758 = vunpack.c.h.b16 %v911
    %v1759 = vunpack.c.l.b16 %v912
    %v1760 = vunpack.c.l.b16 %v913
    %v1761 = vunpack.c.h.b16 %v913
    %v1762 = vunpack.c.l.b16 %v914
    %v1763 = vunpack.c.h.b16 %v914
    %v1764 = vunpack.c.l.b16 %v915
    %v1765 = vunpack.c.l.b16 %v916
    %v1766 = vunpack.c.h.b16 %v916
    %v1767 = vunpack.c.l.b16 %v917
    %v1768 = vunpack.c.h.b16 %v917
    %v1769 = vunpack.c.l.b16 %v918
    %v1770 = vunpack.c.l.b16 %v919
    %v1771 = vunpack.c.h.b16 %v919
    %v1772 = vunpack.c.l.b16 %v920
    %v1773 = vunpack.c.h.b16 %v920
    %v1774 = vunpack.c.l.b16 %v921
    %v1775 = vunpack.c.l.b16 %v922
    %v1776 = vunpack.c.h.b16 %v922
    %v1777 = vunpack.c.l.b16 %v923
    %v1778 = vunpack.c.h.b16 %v923
    %v1779 = vunpack.c.l.b16 %v924
    %v1780 = vunpack.c.l.b16 %v925
    %v1781 = vunpack.c.h.b16 %v925
    %v1782 = vunpack.c.l.b16 %v926
    %v1783 = vunpack.c.h.b16 %v926
    %v1784 = vunpack.c.l.b16 %v927
    %v1785 = vunpack.c.l.b16 %v928
    %v1786 = vunpack.c.h.b16 %v928
    %v1787 = vunpack.c.l.b16 %v929
    %v1788 = vunpack.c.h.b16 %v929
    %v1789 = vunpack.c.l.b16 %v930
    %v1790 = vunpack.c.l.b16 %v931
    %v1791 = vunpack.c.h.b16 %v931
    %v1792 = vunpack.c.l.b16 %v932
    %v1793 = vunpack.c.h.b16 %v932
    %v1794 = vunpack.c.l.b16 %v933
    %v1795 = vunpack.c.l.b16 %v934
    %v1796 = vunpack.c.h.b16 %v934
    %v1797 = vunpack.c.l.b16 %v935
    %v1798 = vunpack.c.h.b16 %v935
    %v1799 = vunpack.c.l.b16 %v936
    %v1800 = vunpack.c.l.b16 %v937
    %v1801 = vunpack.c.h.b16 %v937
    %v1802 = vunpack.c.l.b16 %v938
    %v1803 = vunpack.c.h.b16 %v938
    %v1804 = vunpack.c.l.b16 %v939
    %v1805 = vunpack.c.l.b16 %v940
    %v1806 = vunpack.c.h.b16 %v940
    %v1807 = vunpack.c.l.b16 %v941
    %v1808 = vunpack.c.h.b16 %v941
    %v1809 = vunpack.c.l.b16 %v942
    %v1810 = vunpack.c.l.b16 %v943
    %v1811 = vunpack.c.h.b16 %v943
    %v1812 = vunpack.c.l.b16 %v944
    %v1813 = vunpack.c.h.b16 %v944
    %v1814 = vunpack.c.l.b16 %v945
    %v1815 = vunpack.c.l.b16 %v946
    %v1816 = vunpack.c.h.b16 %v946
    %v1817 = vunpack.c.l.b16 %v947
    %v1818 = vunpack.c.h.b16 %v947
    %v1819 = vunpack.c.l.b16 %v948
    %v1820 = vunpack.c.l.b16 %v949
    %v1821 = vunpack.c.h.b16 %v949
    %v1822 = vunpack.c.l.b16 %v950
    %v1823 = vunpack.c.h.b16 %v950
    %v1824 = vunpack.c.l.b16 %v951
    %v1825 = vunpack.c.l.b16 %v952
    %v1826 = vunpack.c.h.b16 %v952
    %v1827 = vunpack.c.l.b16 %v953
    %v1828 = vunpack.c.h.b16 %v953
    %v1829 = vunpack.c.l.b16 %v954
    %v1830 = vunpack.c.l.b16 %v955
    %v1831 = vunpack.c.h.b16 %v955
    %v1832 = vunpack.c.l.b16 %v956
    %v1833 = vunpack.c.h.b16 %v956
    %v1834 = vunpack.c.l.b16 %v957
    %v1835 = vunpack.c.l.b16 %v958
    %v1836 = vunpack.c.h.b16 %v958
    %v1837 = vunpack.c.l.b16 %v959
    %v1838 = vunpack.c.h.b16 %v959
    %v1839 = vunpack.c.l.b16 %v960
    %v1840 = vunpack.c.l.b16 %v961
    %v1841 = vunpack.c.h.b16 %v961
    %v1842 = vunpack.c.l.b16 %v962
    %v1843 = vunpack.c.h.b16 %v962
    %v1844 = vunpack.c.l.b16 %v963
    %v1845 = vunpack.c.l.b16 %v964
    %v1846 = vunpack.c.h.b16 %v964
    %v1847 = vunpack.c.l.b16 %v965
    %v1848 = vunpack.c.h.b16 %v965
    %v1849 = vunpack.c.l.b16 %v966
    %v1850 = vunpack.c.l.b16 %v967
    %v1851 = vunpack.c.h.b16 %v967
    %v1852 = vunpack.c.l.b16 %v968
    %v1853 = vunpack.c.h.b16 %v968
    %v1854 = vunpack.c.l.b16 %v969
    %v1855 = vunpack.c.l.b16 %v970
    %v1856 = vunpack.c.h.b16 %v970
    %v1857 = vunpack.c.l.b16 %v971
    %v1858 = vunpack.c.h.b16 %v971
    %v1859 = vunpack.c.l.b16 %v972
    %v1860 = vunpack.c.l.b16 %v973
    %v1861 = vunpack.c.h.b16 %v973
    %v1862 = vunpack.c.l.b16 %v974
    %v1863 = vunpack.c.h.b16 %v974
    %v1864 = vunpack.c.l.b16 %v975
    %v1865 = vunpack.c.l.b16 %v976
    %v1866 = vunpack.c.h.b16 %v976
    %v1867 = vunpack.c.l.b16 %v977
    %v1868 = vunpack.c.h.b16 %v977
    %v1869 = vunpack.c.l.b16 %v978
    %v1870 = vunpack.c.l.b16 %v979
    %v1871 = vunpack.c.h.b16 %v979
    %v1872 = vunpack.c.l.b16 %v980
    %v1873 = vunpack.c.h.b16 %v980
    %v1874 = vunpack.c.l.b16 %v981
    %v1875 = vunpack.c.l.b16 %v982
    %v1876 = vunpack.c.h.b16 %v982
    %v1877 = vunpack.c.l.b16 %v983
    %v1878 = vunpack.c.h.b16 %v983
    %v1879 = vunpack.c.l.b16 %v984
    %v1880 = vunpack.c.l.b16 %v985
    %v1881 = vunpack.c.h.b16 %v985
    %v1882 = vunpack.c.l.b16 %v986
    %v1883 = vunpack.c.h.b16 %v986
    %v1884 = vunpack.c.l.b16 %v987
    %v1885 = vunpack.c.l.b16 %v988
    %v1886 = vunpack.c.h.b16 %v988
    %v1887 = vunpack.c.l.b16 %v989
    %v1888 = vunpack.c.h.b16 %v989
    %v1889 = vunpack.c.l.b16 %v990
    %v1890 = vunpack.c.l.b16 %v991
    %v1891 = vunpack.c.h.b16 %v991
    %v1892 = vunpack.c.l.b16 %v992
    %v1893 = vunpack.c.h.b16 %v992
    %v1894 = vunpack.c.l.b16 %v993
    %v1895 = vunpack.c.l.b16 %v994
    %v1896 = vunpack.c.h.b16 %v994
    %v1897 = vunpack.c.l.b16 %v995
    %v1898 = vunpack.c.h.b16 %v995
    %v1899 = vunpack.c.l.b16 %v996
    %v1900 = vunpack.c.l.b16 %v997
    %v1901 = vunpack.c.h.b16 %v997
    %v1902 = vunpack.c.l.b16 %v998
    %v1903 = vunpack.c.h.b16 %v998
    %v1904 = vunpack.c.l.b16 %v999
    %v1905 = vunpack.c.l.b16 %v1000
    %v1906 = vunpack.c.h.b16 %v1000
    %v1907 = vunpack.c.l.b16 %v1001
    %v1908 = vunpack.c.h.b16 %v1001
    %v1909 = vunpack.c.l.b16 %v1002
    %v1910 = vunpack.c.l.b16 %v1003
    %v1911 = vunpack.c.h.b16 %v1003
    %v1912 = vunpack.c.l.b16 %v1004
    %v1913 = vunpack.c.h.b16 %v1004
    %v1914 = vunpack.c.l.b16 %v1005
    %v1915 = vunpack.c.l.b16 %v1006
    %v1916 = vunpack.c.h.b16 %v1006
    %v1917 = vunpack.c.l.b16 %v1007
    %v1918 = vunpack.c.h.b16 %v1007
    %v1919 = vunpack.c.l.b16 %v1008
    %v1920 = vunpack.c.l.b16 %v1009
    %v1921 = vunpack.c.h.b16 %v1009
    %v1922 = vunpack.c.l.b16 %v1010
    %v1923 = vunpack.c.h.b16 %v1010
    %v1924 = vunpack.c.l.b16 %v1011
    %v1925 = vunpack.c.l.b16 %v1012
    %v1926 = vunpack.c.h.b16 %v1012
    %v1927 = vunpack.c.l.b16 %v1013
    %v1928 = vunpack.c.h.b16 %v1013
    %v1929 = vunpack.c.l.b16 %v1014
    %v1930 = vunpack.c.l.b16 %v1015
    %v1931 = vunpack.c.h.b16 %v1015
    %v1932 = vunpack.c.l.b16 %v1016
    %v1933 = vunpack.c.h.b16 %v1016
    %v1934 = vunpack.c.l.b16 %v1017
    %v1935 = vunpack.c.l.b16 %v1018
    %v1936 = vunpack.c.h.b16 %v1018
    %v1937 = vunpack.c.l.b16 %v1019
    %v1938 = vunpack.c.h.b16 %v1019
    %v1939 = vunpack.c.l.b16 %v1020
    %v1940 = vunpack.c.l.b16 %v1021
    %v1941 = vunpack.c.h.b16 %v1021
    %v1942 = vunpack.c.l.b16 %v1022
    %v1943 = vunpack.c.h.b16 %v1022
    %v1944 = vunpack.c.l.b16 %v1023
    %v1945 = vunpack.c.l.b16 %v1024
    %v1946 = vunpack.c.h.b16 %v1024
    %v1947 = vunpack.c.l.b16 %v1025
    %v1948 = vunpack.c.h.b16 %v1025
    %v1949 = vunpack.c.l.b16 %v1026
    %v1950 = vpack.c.b16 %v1395, %v1390
    %v1951 = vpack.c.b16 %v1396, %v1391
    %v1952 = vpack.c.b16 %v1397, %v1392
    %v1953 = vpack.c.b16 %v1398, %v1393
    %v1954 = vpack.c.b16 %v1399, %v1394
    %v1955 = vpack.c.b16 %v1405, %v1400
    %v1956 = vpack.c.b16 %v1406, %v1401
    %v1957 = vpack.c.b16 %v1407, %v1402
    %v1958 = vpack.c.b16 %v1408, %v1403
    %v1959 = vpack.c.b16 %v1409, %v1404
    %v1960 = vpack.c.b16 %v1415, %v1410
    %v1961 = vpack.c.b16 %v1416, %v1411
    %v1962 = vpack.c.b16 %v1417, %v1412
    %v1963 = vpack.c.b16 %v1418, %v1413
    %v1964 = vpack.c.b16 %v1419, %v1414
    %v1965 = vpack.c.b16 %v1425, %v1420
    %v1966 = vpack.c.b16 %v1426, %v1421
    %v1967 = vpack.c.b16 %v1427, %v1422
    %v1968 = vpack.c.b16 %v1428, %v1423
    %v1969 = vpack.c.b16 %v1429, %v1424
    %v1970 = vpack.c.b16 %v1435, %v1430
    %v1971 = vpack.c.b16 %v1436, %v1431
    %v1972 = vpack.c.b16 %v1437, %v1432
    %v1973 = vpack.c.b16 %v1438, %v1433
    %v1974 = vpack.c.b16 %v1439, %v1434
    %v1975 = vpack.c.b16 %v1445, %v1440
    %v1976 = vpack.c.b16 %v1446, %v1441
    %v1977 = vpack.c.b16 %v1447, %v1442
    %v1978 = vpack.c.b16 %v1448, %v1443
    %v1979 = vpack.c.b16 %v1449, %v1444
    %v1980 = vpack.c.b16 %v1455, %v1450
    %v1981 = vpack.c.b16 %v1456, %v1451
    %v1982 = vpack.c.b16 %v1457, %v1452
    %v1983 = vpack.c.b16 %v1458, %v1453
    %v1984 = vpack.c.b16 %v1459, %v1454
    %v1985 = vpack.c.b16 %v1465, %v1460
    %v1986 = vpack.c.b16 %v1466, %v1461
    %v1987 = vpack.c.b16 %v1467, %v1462
    %v1988 = vpack.c.b16 %v1468, %v1463
    %v1989 = vpack.c.b16 %v1469, %v1464
    %v1990 = vpack.c.b16 %v1475, %v1470
    %v1991 = vpack.c.b16 %v1476, %v1471
    %v1992 = vpack.c.b16 %v1477, %v1472
    %v1993 = vpack.c.b16 %v1478, %v1473
    %v1994 = vpack.c.b16 %v1479, %v1474
    %v1995 = vpack.c.b16 %v1485, %v1480
    %v1996 = vpack.c.b16 %v1486, %v1481
    %v1997 = vpack.c.b16 %v1487, %v1482
    %v1998 = vpack.c.b16 %v1488, %v1483
    %v1999 = vpack.c.b16 %v1489, %v1484
    %v2000 = vpack.c.b16 %v1495, %v1490
    %v2001 = vpack.c.b16 %v1496, %v1491
    %v2002 = vpack.c.b16 %v1497, %v1492
    %v2003 = vpack.c.b16 %v1498, %v1493
    %v2004 = vpack.c.b16 %v1499, %v1494
    %v2005 = vpack.c.b16 %v1505, %v1500
    %v2006 = vpack.c.b16 %v1506, %v1501
    %v2007 = vpack.c.b16 %v1507, %v1502
    %v2008 = vpack.c.b16 %v1508, %v1503
    %v2009 = vpack.c.b16 %v1509, %v1504
    %v2010 = vpack.c.b16 %v1515, %v1510
    %v2011 = vpack.c.b16 %v1516, %v1511
    %v2012 = vpack.c.b16 %v1517, %v1512
    %v2013 = vpack.c.b16 %v1518, %v1513
    %v2014 = vpack.c.b16 %v1519, %v1514
    %v2015 = vpack.c.b16 %v1525, %v1520
    %v2016 = vpack.c.b16 %v1526, %v1521
    %v2017 = vpack.c.b16 %v1527, %v1522
    %v2018 = vpack.c.b16 %v1528, %v1523
    %v2019 = vpack.c.b16 %v1529, %v1524
    %v2020 = vpack.c.b16 %v1535, %v1530
    %v2021 = vpack.c.b16 %v1536, %v1531
    %v2022 = vpack.c.b16 %v1537, %v1532
    %v2023 = vpack.c.b16 %v1538, %v1533
    %v2024 = vpack.c.b16 %v1539, %v1534
    %v2025 = vpack.c.b16 %v1545, %v1540
    %v2026 = vpack.c.b16 %v1546, %v1541
    %v2027 = vpack.c.b16 %v1547, %v1542
    %v2028 = vpack.c.b16 %v1548, %v1543
    %v2029 = vpack.c.b16 %v1549, %v1544
    %v2030 = vpack.c.b16 %v1555, %v1550
    %v2031 = vpack.c.b16 %v1556, %v1551
    %v2032 = vpack.c.b16 %v1557, %v1552
    %v2033 = vpack.c.b16 %v1558, %v1553
    %v2034 = vpack.c.b16 %v1559, %v1554
    %v2035 = vpack.c.b16 %v1565, %v1560
    %v2036 = vpack.c.b16 %v1566, %v1561
    %v2037 = vpack.c.b16 %v1567, %v1562
    %v2038 = vpack.c.b16 %v1568, %v1563
    %v2039 = vpack.c.b16 %v1569, %v1564
    %v2040 = vpack.c.b16 %v1575, %v1570
    %v2041 = vpack.c.b16 %v1576, %v1571
    %v2042 = vpack.c.b16 %v1577, %v1572
    %v2043 = vpack.c.b16 %v1578, %v1573
    %v2044 = vpack.c.b16 %v1579, %v1574
    %v2045 = vpack.c.b16 %v1585, %v1580
    %v2046 = vpack.c.b16 %v1586, %v1581
    %v2047 = vpack.c.b16 %v1587, %v1582
    %v2048 = vpack.c.b16 %v1588, %v1583
    %v2049 = vpack.c.b16 %v1589, %v1584
    %v2050 = vpack.c.b16 %v1595, %v1590
    %v2051 = vpack.c.b16 %v1596, %v1591
    %v2052 = vpack.c.b16 %v1597, %v1592
    %v2053 = vpack.c.b16 %v1598, %v1593
    %v2054 = vpack.c.b16 %v1599, %v1594
    %v2055 = vpack.c.b16 %v1605, %v1600
    %v2056 = vpack.c.b16 %v1606, %v1601
    %v2057 = vpack.c.b16 %v1607, %v1602
    %v2058 = vpack.c.b16 %v1608, %v1603
    %v2059 = vpack.c.b16 %v1609, %v1604
    %v2060 = vpack.c.b16 %v1615, %v1610
    %v2061 = vpack.c.b16 %v1616, %v1611
    %v2062 = vpack.c.b16 %v1617, %v1612
    %v2063 = vpack.c.b16 %v1618, %v1613
    %v2064 = vpack.c.b16 %v1619, %v1614
    %v2065 = vpack.c.b16 %v1625, %v1620
    %v2066 = vpack.c.b16 %v1626, %v1621
    %v2067 = vpack.c.b16 %v1627, %v1622
    %v2068 = vpack.c.b16 %v1628, %v1623
    %v2069 = vpack.c.b16 %v1629, %v1624
    %v2070 = vpack.c.b16 %v1635, %v1630
    %v2071 = vpack.c.b16 %v1636, %v1631
    %v2072 = vpack.c.b16 %v1637, %v1632
    %v2073 = vpack.c.b16 %v1638, %v1633
    %v2074 = vpack.c.b16 %v1639, %v1634
    %v2075 = vpack.c.b16 %v1645, %v1640
    %v2076 = vpack.c.b16 %v1646, %v1641
    %v2077 = vpack.c.b16 %v1647, %v1642
    %v2078 = vpack.c.b16 %v1648, %v1643
    %v2079 = vpack.c.b16 %v1649, %v1644
    %v2080 = vpack.c.b16 %v1655, %v1650
    %v2081 = vpack.c.b16 %v1656, %v1651
    %v2082 = vpack.c.b16 %v1657, %v1652
    %v2083 = vpack.c.b16 %v1658, %v1653
    %v2084 = vpack.c.b16 %v1659, %v1654
    %v2085 = vpack.c.b16 %v1665, %v1660
    %v2086 = vpack.c.b16 %v1666, %v1661
    %v2087 = vpack.c.b16 %v1667, %v1662
    %v2088 = vpack.c.b16 %v1668, %v1663
    %v2089 = vpack.c.b16 %v1669, %v1664
    %v2090 = vpack.c.b16 %v1675, %v1670
    %v2091 = vpack.c.b16 %v1676, %v1671
    %v2092 = vpack.c.b16 %v1677, %v1672
    %v2093 = vpack.c.b16 %v1678, %v1673
    %v2094 = vpack.c.b16 %v1679, %v1674
    %v2095 = vpack.c.b16 %v1685, %v1680
    %v2096 = vpack.c.b16 %v1686, %v1681
    %v2097 = vpack.c.b16 %v1687, %v1682
    %v2098 = vpack.c.b16 %v1688, %v1683
    %v2099 = vpack.c.b16 %v1689, %v1684
    %v2100 = vpack.c.b16 %v1695, %v1690
    %v2101 = vpack.c.b16 %v1696, %v1691
    %v2102 = vpack.c.b16 %v1697, %v1692
    %v2103 = vpack.c.b16 %v1698, %v1693
    %v2104 = vpack.c.b16 %v1699, %v1694
    %v2105 = vpack.c.b16 %v1705, %v1700
    %v2106 = vpack.c.b16 %v1706, %v1701
    %v2107 = vpack.c.b16 %v1707, %v1702
    %v2108 = vpack.c.b16 %v1708, %v1703
    %v2109 = vpack.c.b16 %v1709, %v1704
    %v2110 = vpack.c.b16 %v1715, %v1710
    %v2111 = vpack.c.b16 %v1716, %v1711
    %v2112 = vpack.c.b16 %v1717, %v1712
    %v2113 = vpack.c.b16 %v1718, %v1713
    %v2114 = vpack.c.b16 %v1719, %v1714
    %v2115 = vpack.c.b16 %v1725, %v1720
    %v2116 = vpack.c.b16 %v1726, %v1721
    %v2117 = vpack.c.b16 %v1727, %v1722
    %v2118 = vpack.c.b16 %v1728, %v1723
    %v2119 = vpack.c.b16 %v1729, %v1724
    %v2120 = vpack.c.b16 %v1735, %v1730
    %v2121 = vpack.c.b16 %v1736, %v1731
    %v2122 = vpack.c.b16 %v1737, %v1732
    %v2123 = vpack.c.b16 %v1738, %v1733
    %v2124 = vpack.c.b16 %v1739, %v1734
    %v2125 = vpack.c.b16 %v1745, %v1740
    %v2126 = vpack.c.b16 %v1746, %v1741
    %v2127 = vpack.c.b16 %v1747, %v1742
    %v2128 = vpack.c.b16 %v1748, %v1743
    %v2129 = vpack.c.b16 %v1749, %v1744
    %v2130 = vpack.c.b16 %v1755, %v1750
    %v2131 = vpack.c.b16 %v1756, %v1751
    %v2132 = vpack.c.b16 %v1757, %v1752
    %v2133 = vpack.c.b16 %v1758, %v1753
    %v2134 = vpack.c.b16 %v1759, %v1754
    %v2135 = vpack.c.b16 %v1765, %v1760
    %v2136 = vpack.c.b16 %v1766, %v1761
    %v2137 = vpack.c.b16 %v1767, %v1762
    %v2138 = vpack.c.b16 %v1768, %v1763
    %v2139 = vpack.c.b16 %v1769, %v1764
    %v2140 = vpack.c.b16 %v1775, %v1770
    %v2141 = vpack.c.b16 %v1776, %v1771
    %v2142 = vpack.c.b16 %v1777, %v1772
    %v2143 = vpack.c.b16 %v1778, %v1773
    %v2144 = vpack.c.b16 %v1779, %v1774
    %v2145 = vpack.c.b16 %v1785, %v1780
    %v2146 = vpack.c.b16 %v1786, %v1781
    %v2147 = vpack.c.b16 %v1787, %v1782
    %v2148 = vpack.c.b16 %v1788, %v1783
    %v2149 = vpack.c.b16 %v1789, %v1784
    %v2150 = vpack.c.b16 %v1795, %v1790
    %v2151 = vpack.c.b16 %v1796, %v1791
    %v2152 = vpack.c.b16 %v1797, %v1792
    %v2153 = vpack.c.b16 %v1798, %v1793
    %v2154 = vpack.c.b16 %v1799, %v1794
    %v2155 = vpack.c.b16 %v1805, %v1800
    %v2156 = vpack.c.b16 %v1806, %v1801
    %v2157 = vpack.c.b16 %v1807, %v1802
    %v2158 = vpack.c.b16 %v1808, %v1803
    %v2159 = vpack.c.b16 %v1809, %v1804
    %v2160 = vpack.c.b16 %v1815, %v1810
    %v2161 = vpack.c.b16 %v1816, %v1811
    %v2162 = vpack.c.b16 %v1817, %v1812
    %v2163 = vpack.c.b16 %v1818, %v1813
    %v2164 = vpack.c.b16 %v1819, %v1814
    %v2165 = vpack.c.b16 %v1825, %v1820
    %v2166 = vpack.c.b16 %v1826, %v1821
    %v2167 = vpack.c.b16 %v1827, %v1822
    %v2168 = vpack.c.b16 %v1828, %v1823
    %v2169 = vpack.c.b16 %v1829, %v1824
    %v2170 = vpack.c.b16 %v1835, %v1830
    %v2171 = vpack.c.b16 %v1836, %v1831
    %v2172 = vpack.c.b16 %v1837, %v1832
    %v2173 = vpack.c.b16 %v1838, %v1833
    %v2174 = vpack.c.b16 %v1839, %v1834
    %v2175 = vpack.c.b16 %v1845, %v1840
    %v2176 = vpack.c.b16 %v1846, %v1841
    %v2177 = vpack.c.b16 %v1847, %v1842
    %v2178 = vpack.c.b16 %v1848, %v1843
    %v2179 = vpack.c.b16 %v1849, %v1844
    %v2180 = vpack.c.b16 %v1855, %v1850
    %v2181 = vpack.c.b16 %v1856, %v1851
    %v2182 = vpack.c.b16 %v1857, %v1852
    %v2183 = vpack.c.b16 %v1858, %v1853
    %v2184 = vpack.c.b16 %v1859, %v1854
    %v2185 = vpack.c.b16 %v1865, %v1860
    %v2186 = vpack.c.b16 %v1866, %v1861
    %v2187 = vpack.c.b16 %v1867, %v1862
    %v2188 = vpack.c.b16 %v1868, %v1863
    %v2189 = vpack.c.b16 %v1869, %v1864
    %v2190 = vpack.c.b16 %v1875, %v1870
    %v2191 = vpack.c.b16 %v1876, %v1871
    %v2192 = vpack.c.b16 %v1877, %v1872
    %v2193 = vpack.c.b16 %v1878, %v1873
    %v2194 = vpack.c.b16 %v1879, %v1874
    %v2195 = vpack.c.b16 %v1885, %v1880
    %v2196 = vpack.c.b16 %v1886, %v1881
    %v2197 = vpack.c.b16 %v1887, %v1882
    %v2198 = vpack.c.b16 %v1888, %v1883
    %v2199 = vpack.c.b16 %v1889, %v1884
    %v2200 = vpack.c.b16 %v1895, %v1890
    %v2201 = vpack.c.b16 %v1896, %v1891
    %v2202 = vpack.c.b16 %v1897, %v1892
    %v2203 = vpack.c.b16 %v1898, %v1893
    %v2204 = vpack.c.b16 %v1899, %v1894
    %v2205 = vpack.c.b16 %v1905, %v1900
    %v2206 = vpack.c.b16 %v1906, %v1901
    %v2207 = vpack.c.b16 %v1907, %v1902
    %v2208 = vpack.c.b16 %v1908, %v1903
    %v2209 = vpack.c.b16 %v1909, %v1904
    %v2210 = vpack.c.b16 %v1915, %v1910
    %v2211 = vpack.c.b16 %v1916, %v1911
    %v2212 = vpack.c.b16 %v1917, %v1912
    %v2213 = vpack.c.b16 %v1918, %v1913
    %v2214 = vpack.c.b16 %v1919, %v1914
    %v2215 = vpack.c.b16 %v1925, %v1920
    %v2216 = vpack.c.b16 %v1926, %v1921
    %v2217 = vpack.c.b16 %v1927, %v1922
    %v2218 = vpack.c.b16 %v1928, %v1923
    %v2219 = vpack.c.b16 %v1929, %v1924
    %v2220 = vpack.c.b16 %v1935, %v1930
    %v2221 = vpack.c.b16 %v1936, %v1931
    %v2222 = vpack.c.b16 %v1937, %v1932
    %v2223 = vpack.c.b16 %v1938, %v1933
    %v2224 = vpack.c.b16 %v1939, %v1934
    %v2225 = vpack.c.b16 %v1945, %v1940
    %v2226 = vpack.c.b16 %v1946, %v1941
    %v2227 = vpack.c.b16 %v1947, %v1942
    %v2228 = vpack.c.b16 %v1948, %v1943
    %v2229 = vpack.c.b16 %v1949, %v1944
    %2510 = vmatprep.subr.bf16.mxu0 %v1951
    %2511 = vmatpush1.bf16.msra.mxu0 %v1950
    %2512 = vmatprep.subr.bf16.mxu0 %v1956
    %2513 = vmatpush1.bf16.msra.mxu0 %v1955
    %2514 = vmatprep.subr.bf16.mxu0 %v1961
    %2515 = vmatpush1.bf16.msra.mxu0 %v1960
    %2516 = vmatprep.subr.bf16.mxu0 %v1966
    %2517 = vmatpush1.bf16.msra.mxu0 %v1965
    %2518 = vmatprep.subr.bf16.mxu0 %v1971
    %2519 = vmatpush1.bf16.msra.mxu0 %v1970
    %2520 = vmatprep.subr.bf16.mxu0 %v1976
    %2521 = vmatpush1.bf16.msra.mxu0 %v1975
    %2522 = vmatprep.subr.bf16.mxu0 %v1981
    %2523 = vmatpush1.bf16.msra.mxu0 %v1980
    %2524 = vmatprep.subr.bf16.mxu0 %v1986
    %2525 = vmatpush1.bf16.msra.mxu0 %v1985
    %2526 = vmatprep.subr.bf16.mxu0 %v1991
    %2527 = vmatpush1.bf16.msra.mxu0 %v1990
    %2528 = vmatprep.subr.bf16.mxu0 %v1996
    %2529 = vmatpush1.bf16.msra.mxu0 %v1995
    %2530 = vmatprep.subr.bf16.mxu0 %v2001
    %2531 = vmatpush1.bf16.msra.mxu0 %v2000
    %2532 = vmatprep.subr.bf16.mxu0 %v2006
    %2533 = vmatpush1.bf16.msra.mxu0 %v2005
    %2534 = vmatprep.subr.bf16.mxu0 %v2011
    %2535 = vmatpush1.bf16.msra.mxu0 %v2010
    %2536 = vmatprep.subr.bf16.mxu0 %v2016
    %2537 = vmatpush1.bf16.msra.mxu0 %v2015
    %2538 = vmatprep.subr.bf16.mxu0 %v2021
    %2539 = vmatpush1.bf16.msra.mxu0 %v2020
    %2540 = vmatprep.subr.bf16.mxu0 %v2026
    %2541 = vmatpush1.bf16.msra.mxu0 %v2025
    %2542 = vmatprep.mubr.bf16.mxu0 %v685
    %2543 = vmatmul.mubr.bf16.gmra.mrb[0].mxu0 %v684
    %v2544 = vpop.f32.mrb[0].mxu0
    %v2545 = vadd.f32 %v1032, %v2544
    %v2546 = vpop.f32.mrb[0].mxu0
    %v2547 = vadd.f32 %v1036, %v2546
    %v2548 = vpop.f32.mrb[0].mxu0
    %v2549 = vadd.f32 %v1032, %v2548
    %v2550 = vpop.f32.mrb[0].mxu0
    %v2551 = vadd.f32 %v1036, %v2550
    %2552 = vdwg.mxu0
    %2553 = vmatprep.subr.bf16.mxu0 %v2031
    %2554 = vmatpush1.bf16.msra.mxu0 %v2030
    %2555 = vmatprep.subr.bf16.mxu0 %v2036
    %2556 = vmatpush1.bf16.msra.mxu0 %v2035
    %2557 = vmatprep.subr.bf16.mxu0 %v2041
    %2558 = vmatpush1.bf16.msra.mxu0 %v2040
    %2559 = vmatprep.subr.bf16.mxu0 %v2046
    %2560 = vmatpush1.bf16.msra.mxu0 %v2045
    %2561 = vmatprep.subr.bf16.mxu0 %v2051
    %2562 = vmatpush1.bf16.msra.mxu0 %v2050
    %2563 = vmatprep.subr.bf16.mxu0 %v2056
    %2564 = vmatpush1.bf16.msra.mxu0 %v2055
    %2565 = vmatprep.subr.bf16.mxu0 %v2061
    %2566 = vmatpush1.bf16.msra.mxu0 %v2060
    %2567 = vmatprep.subr.bf16.mxu0 %v2066
    %2568 = vmatpush1.bf16.msra.mxu0 %v2065
    %2569 = vmatprep.subr.bf16.mxu0 %v2071
    %2570 = vmatpush1.bf16.msra.mxu0 %v2070
    %2571 = vmatprep.subr.bf16.mxu0 %v2076
    %2572 = vmatpush1.bf16.msra.mxu0 %v2075
    %2573 = vmatprep.subr.bf16.mxu0 %v2081
    %2574 = vmatpush1.bf16.msra.mxu0 %v2080
    %2575 = vmatprep.subr.bf16.mxu0 %v2086
    %2576 = vmatpush1.bf16.msra.mxu0 %v2085
    %2577 = vmatprep.subr.bf16.mxu0 %v2091
    %2578 = vmatpush1.bf16.msra.mxu0 %v2090
    %2579 = vmatprep.subr.bf16.mxu0 %v2096
    %2580 = vmatpush1.bf16.msra.mxu0 %v2095
    %2581 = vmatprep.subr.bf16.mxu0 %v2101
    %2582 = vmatpush1.bf16.msra.mxu0 %v2100
    %2583 = vmatprep.subr.bf16.mxu0 %v2106
    %2584 = vmatpush1.bf16.msra.mxu0 %v2105
    %2585 = vmatprep.mubr.bf16.mxu0 %v687
    %2586 = vmatmul.mubr.bf16.gmra.mrb[0].mxu0 %v686
    %v2587 = vpop.f32.mrb[0].mxu0
    %v2588 = vadd.f32 %v2545, %v2587
    %v2589 = vpop.f32.mrb[0].mxu0
    %v2590 = vadd.f32 %v2547, %v2589
    %v2591 = vpop.f32.mrb[0].mxu0
    %v2592 = vadd.f32 %v2549, %v2591
    %v2593 = vpop.f32.mrb[0].mxu0
    %v2594 = vadd.f32 %v2551, %v2593
    %2595 = vdwg.mxu0
    %2596 = vmatprep.subr.bf16.mxu0 %v2111
    %2597 = vmatpush1.bf16.msra.mxu0 %v2110
    %2598 = vmatprep.subr.bf16.mxu0 %v2116
    %2599 = vmatpush1.bf16.msra.mxu0 %v2115
    %2600 = vmatprep.subr.bf16.mxu0 %v2121
    %2601 = vmatpush1.bf16.msra.mxu0 %v2120
    %2602 = vmatprep.subr.bf16.mxu0 %v2126
    %2603 = vmatpush1.bf16.msra.mxu0 %v2125
    %2604 = vmatprep.subr.bf16.mxu0 %v2131
    %2605 = vmatpush1.bf16.msra.mxu0 %v2130
    %2606 = vmatprep.subr.bf16.mxu0 %v2136
    %2607 = vmatpush1.bf16.msra.mxu0 %v2135
    %2608 = vmatprep.subr.bf16.mxu0 %v2141
    %2609 = vmatpush1.bf16.msra.mxu0 %v2140
    %2610 = vmatprep.subr.bf16.mxu0 %v2146
    %2611 = vmatpush1.bf16.msra.mxu0 %v2145
    %2612 = vmatprep.subr.bf16.mxu0 %v2151
    %2613 = vmatpush1.bf16.msra.mxu0 %v2150
    %2614 = vmatprep.subr.bf16.mxu0 %v2156
    %2615 = vmatpush1.bf16.msra.mxu0 %v2155
    %2616 = vmatprep.subr.bf16.mxu0 %v2161
    %2617 = vmatpush1.bf16.msra.mxu0 %v2160
    %2618 = vmatprep.subr.bf16.mxu0 %v2166
    %2619 = vmatpush1.bf16.msra.mxu0 %v2165
    %2620 = vmatprep.subr.bf16.mxu0 %v2171
    %2621 = vmatpush1.bf16.msra.mxu0 %v2170
    %2622 = vmatprep.subr.bf16.mxu0 %v2176
    %2623 = vmatpush1.bf16.msra.mxu0 %v2175
    %2624 = vmatprep.subr.bf16.mxu0 %v2181
    %2625 = vmatpush1.bf16.msra.mxu0 %v2180
    %2626 = vmatprep.subr.bf16.mxu0 %v2186
    %2627 = vmatpush1.bf16.msra.mxu0 %v2185
    %2628 = vmatprep.mubr.bf16.mxu0 %v689
    %2629 = vmatmul.mubr.bf16.gmra.mrb[0].mxu0 %v688
    %v2630 = vpop.f32.mrb[0].mxu0
    %v2631 = vadd.f32 %v2588, %v2630
    %v2632 = vpop.f32.mrb[0].mxu0
    %v2633 = vadd.f32 %v2590, %v2632
    %v2634 = vpop.f32.mrb[0].mxu0
    %v2635 = vadd.f32 %v2592, %v2634
    %v2636 = vpop.f32.mrb[0].mxu0
    %v2637 = vadd.f32 %v2594, %v2636
    %2638 = vdwg.mxu0
    %2639 = vmatprep.subr.bf16.mxu0 %v2191
    %2640 = vmatpush1.bf16.msra.mxu0 %v2190
    %2641 = vmatprep.subr.bf16.mxu0 %v2196
    %2642 = vmatpush1.bf16.msra.mxu0 %v2195
    %2643 = vmatprep.subr.bf16.mxu0 %v2201
    %2644 = vmatpush1.bf16.msra.mxu0 %v2200
    %2645 = vmatprep.subr.bf16.mxu0 %v2206
    %2646 = vmatpush1.bf16.msra.mxu0 %v2205
    %2647 = vmatprep.subr.bf16.mxu0 %v2211
    %2648 = vmatpush1.bf16.msra.mxu0 %v2210
    %2649 = vmatprep.subr.bf16.mxu0 %v2216
    %2650 = vmatpush1.bf16.msra.mxu0 %v2215
    %2651 = vmatprep.subr.bf16.mxu0 %v2221
    %2652 = vmatpush1.bf16.msra.mxu0 %v2220
    %2653 = vmatprep.subr.bf16.mxu0 %v2226
    %2654 = vmatpush1.bf16.msra.mxu0 %v2225
    %2655 = vmatprep.subr.bf16.mxu0 0
    %2656 = vmatpush1.bf16.msra.mxu0 0
    %2657 = vmatprep.subr.bf16.mxu0 0
    %2658 = vmatpush1.bf16.msra.mxu0 0
    %2659 = vmatprep.subr.bf16.mxu0 0
    %2660 = vmatpush1.bf16.msra.mxu0 0
    %2661 = vmatprep.subr.bf16.mxu0 0
    %2662 = vmatpush1.bf16.msra.mxu0 0
    %2663 = vmatprep.subr.bf16.mxu0 0
    %2664 = vmatpush1.bf16.msra.mxu0 0
    %2665 = vmatprep.subr.bf16.mxu0 0
    %2666 = vmatpush1.bf16.msra.mxu0 0
    %2667 = vmatprep.subr.bf16.mxu0 0
    %2668 = vmatpush1.bf16.msra.mxu0 0
    %2669 = vmatprep.subr.bf16.mxu0 0
    %2670 = vmatpush1.bf16.msra.mxu0 0
    %2671 = vmatprep.mubr.bf16.mxu0 0
    %2672 = vmatmul.mubr.bf16.gmra.mrb[0].mxu0 %v690
    %v2673 = vpop.f32.mrb[0].mxu0
    %v2674 = vadd.f32 %v2631, %v2673
    %v2675 = vpop.f32.mrb[0].mxu0
    %v2676 = vadd.f32 %v2633, %v2675
    %v2677 = vpop.f32.mrb[0].mxu0
    %v2678 = vadd.f32 %v2635, %v2677
    %v2679 = vpop.f32.mrb[0].mxu0
    %v2680 = vadd.f32 %v2637, %v2679
    %2681 = vdwg.mxu0
    %2682 = vmatprep.subr.bf16.mxu0 %v1953
    %2683 = vmatpush1.bf16.msra.mxu0 %v1952
    %2684 = vmatprep.subr.bf16.mxu0 %v1958
    %2685 = vmatpush1.bf16.msra.mxu0 %v1957
    %2686 = vmatprep.subr.bf16.mxu0 %v1963
    %2687 = vmatpush1.bf16.msra.mxu0 %v1962
    %2688 = vmatprep.subr.bf16.mxu0 %v1968
    %2689 = vmatpush1.bf16.msra.mxu0 %v1967
    %2690 = vmatprep.subr.bf16.mxu0 %v1973
    %2691 = vmatpush1.bf16.msra.mxu0 %v1972
    %2692 = vmatprep.subr.bf16.mxu0 %v1978
    %2693 = vmatpush1.bf16.msra.mxu0 %v1977
    %2694 = vmatprep.subr.bf16.mxu0 %v1983
    %2695 = vmatpush1.bf16.msra.mxu0 %v1982
    %2696 = vmatprep.subr.bf16.mxu0 %v1988
    %2697 = vmatpush1.bf16.msra.mxu0 %v1987
    %2698 = vmatprep.subr.bf16.mxu0 %v1993
    %2699 = vmatpush1.bf16.msra.mxu0 %v1992
    %2700 = vmatprep.subr.bf16.mxu0 %v1998
    %2701 = vmatpush1.bf16.msra.mxu0 %v1997
    %2702 = vmatprep.subr.bf16.mxu0 %v2003
    %2703 = vmatpush1.bf16.msra.mxu0 %v2002
    %2704 = vmatprep.subr.bf16.mxu0 %v2008
    %2705 = vmatpush1.bf16.msra.mxu0 %v2007
    %2706 = vmatprep.subr.bf16.mxu0 %v2013
    %2707 = vmatpush1.bf16.msra.mxu0 %v2012
    %2708 = vmatprep.subr.bf16.mxu0 %v2018
    %2709 = vmatpush1.bf16.msra.mxu0 %v2017
    %2710 = vmatprep.subr.bf16.mxu0 %v2023
    %2711 = vmatpush1.bf16.msra.mxu0 %v2022
    %2712 = vmatprep.subr.bf16.mxu0 %v2028
    %2713 = vmatpush1.bf16.msra.mxu0 %v2027
    %2714 = vmatprep.mubr.bf16.mxu0 %v685
    %2715 = vmatmul.mubr.bf16.gmra.mrb[0].mxu0 %v684
    %v2716 = vpop.f32.mrb[0].mxu0
    %v2717 = vadd.f32 %v1040, %v2716
    %v2718 = vpop.f32.mrb[0].mxu0
    %v2719 = vadd.f32 %v1044, %v2718
    %v2720 = vpop.f32.mrb[0].mxu0
    %v2721 = vadd.f32 %v1040, %v2720
    %v2722 = vpop.f32.mrb[0].mxu0
    %v2723 = vadd.f32 %v1044, %v2722
    %2724 = vdwg.mxu0
    %2725 = vmatprep.subr.bf16.mxu0 %v2033
    %2726 = vmatpush1.bf16.msra.mxu0 %v2032
    %2727 = vmatprep.subr.bf16.mxu0 %v2038
    %2728 = vmatpush1.bf16.msra.mxu0 %v2037
    %2729 = vmatprep.subr.bf16.mxu0 %v2043
    %2730 = vmatpush1.bf16.msra.mxu0 %v2042
    %2731 = vmatprep.subr.bf16.mxu0 %v2048
    %2732 = vmatpush1.bf16.msra.mxu0 %v2047
    %2733 = vmatprep.subr.bf16.mxu0 %v2053
    %2734 = vmatpush1.bf16.msra.mxu0 %v2052
    %2735 = vmatprep.subr.bf16.mxu0 %v2058
    %2736 = vmatpush1.bf16.msra.mxu0 %v2057
    %2737 = vmatprep.subr.bf16.mxu0 %v2063
    %2738 = vmatpush1.bf16.msra.mxu0 %v2062
    %2739 = vmatprep.subr.bf16.mxu0 %v2068
    %2740 = vmatpush1.bf16.msra.mxu0 %v2067
    %2741 = vmatprep.subr.bf16.mxu0 %v2073
    %2742 = vmatpush1.bf16.msra.mxu0 %v2072
    %2743 = vmatprep.subr.bf16.mxu0 %v2078
    %2744 = vmatpush1.bf16.msra.mxu0 %v2077
    %2745 = vmatprep.subr.bf16.mxu0 %v2083
    %2746 = vmatpush1.bf16.msra.mxu0 %v2082
    %2747 = vmatprep.subr.bf16.mxu0 %v2088
    %2748 = vmatpush1.bf16.msra.mxu0 %v2087
    %2749 = vmatprep.subr.bf16.mxu0 %v2093
    %2750 = vmatpush1.bf16.msra.mxu0 %v2092
    %2751 = vmatprep.subr.bf16.mxu0 %v2098
    %2752 = vmatpush1.bf16.msra.mxu0 %v2097
    %2753 = vmatprep.subr.bf16.mxu0 %v2103
    %2754 = vmatpush1.bf16.msra.mxu0 %v2102
    %2755 = vmatprep.subr.bf16.mxu0 %v2108
    %2756 = vmatpush1.bf16.msra.mxu0 %v2107
    %2757 = vmatprep.mubr.bf16.mxu0 %v687
    %2758 = vmatmul.mubr.bf16.gmra.mrb[0].mxu0 %v686
    %v2759 = vpop.f32.mrb[0].mxu0
    %v2760 = vadd.f32 %v2717, %v2759
    %v2761 = vpop.f32.mrb[0].mxu0
    %v2762 = vadd.f32 %v2719, %v2761
    %v2763 = vpop.f32.mrb[0].mxu0
    %v2764 = vadd.f32 %v2721, %v2763
    %v2765 = vpop.f32.mrb[0].mxu0
    %v2766 = vadd.f32 %v2723, %v2765
    %2767 = vdwg.mxu0
    %2768 = vmatprep.subr.bf16.mxu0 %v2113
    %2769 = vmatpush1.bf16.msra.mxu0 %v2112
    %2770 = vmatprep.subr.bf16.mxu0 %v2118
    %2771 = vmatpush1.bf16.msra.mxu0 %v2117
    %2772 = vmatprep.subr.bf16.mxu0 %v2123
    %2773 = vmatpush1.bf16.msra.mxu0 %v2122
    %2774 = vmatprep.subr.bf16.mxu0 %v2128
    %2775 = vmatpush1.bf16.msra.mxu0 %v2127
    %2776 = vmatprep.subr.bf16.mxu0 %v2133
    %2777 = vmatpush1.bf16.msra.mxu0 %v2132
    %2778 = vmatprep.subr.bf16.mxu0 %v2138
    %2779 = vmatpush1.bf16.msra.mxu0 %v2137
    %2780 = vmatprep.subr.bf16.mxu0 %v2143
    %2781 = vmatpush1.bf16.msra.mxu0 %v2142
    %2782 = vmatprep.subr.bf16.mxu0 %v2148
    %2783 = vmatpush1.bf16.msra.mxu0 %v2147
    %2784 = vmatprep.subr.bf16.mxu0 %v2153
    %2785 = vmatpush1.bf16.msra.mxu0 %v2152
    %2786 = vmatprep.subr.bf16.mxu0 %v2158
    %2787 = vmatpush1.bf16.msra.mxu0 %v2157
    %2788 = vmatprep.subr.bf16.mxu0 %v2163
    %2789 = vmatpush1.bf16.msra.mxu0 %v2162
    %2790 = vmatprep.subr.bf16.mxu0 %v2168
    %2791 = vmatpush1.bf16.msra.mxu0 %v2167
    %2792 = vmatprep.subr.bf16.mxu0 %v2173
    %2793 = vmatpush1.bf16.msra.mxu0 %v2172
    %2794 = vmatprep.subr.bf16.mxu0 %v2178
    %2795 = vmatpush1.bf16.msra.mxu0 %v2177
    %2796 = vmatprep.subr.bf16.mxu0 %v2183
    %2797 = vmatpush1.bf16.msra.mxu0 %v2182
    %2798 = vmatprep.subr.bf16.mxu0 %v2188
    %2799 = vmatpush1.bf16.msra.mxu0 %v2187
    %2800 = vmatprep.mubr.bf16.mxu0 %v689
    %2801 = vmatmul.mubr.bf16.gmra.mrb[0].mxu0 %v688
    %v2802 = vpop.f32.mrb[0].mxu0
    %v2803 = vadd.f32 %v2760, %v2802
    %v2804 = vpop.f32.mrb[0].mxu0
    %v2805 = vadd.f32 %v2762, %v2804
    %v2806 = vpop.f32.mrb[0].mxu0
    %v2807 = vadd.f32 %v2764, %v2806
    %v2808 = vpop.f32.mrb[0].mxu0
    %v2809 = vadd.f32 %v2766, %v2808
    %2810 = vdwg.mxu0
    %2811 = vmatprep.subr.bf16.mxu0 %v2193
    %2812 = vmatpush1.bf16.msra.mxu0 %v2192
    %2813 = vmatprep.subr.bf16.mxu0 %v2198
    %2814 = vmatpush1.bf16.msra.mxu0 %v2197
    %2815 = vmatprep.subr.bf16.mxu0 %v2203
    %2816 = vmatpush1.bf16.msra.mxu0 %v2202
    %2817 = vmatprep.subr.bf16.mxu0 %v2208
    %2818 = vmatpush1.bf16.msra.mxu0 %v2207
    %2819 = vmatprep.subr.bf16.mxu0 %v2213
    %2820 = vmatpush1.bf16.msra.mxu0 %v2212
    %2821 = vmatprep.subr.bf16.mxu0 %v2218
    %2822 = vmatpush1.bf16.msra.mxu0 %v2217
    %2823 = vmatprep.subr.bf16.mxu0 %v2223
    %2824 = vmatpush1.bf16.msra.mxu0 %v2222
    %2825 = vmatprep.subr.bf16.mxu0 %v2228
    %2826 = vmatpush1.bf16.msra.mxu0 %v2227
    %2827 = vmatprep.subr.bf16.mxu0 0
    %2828 = vmatpush1.bf16.msra.mxu0 0
    %2829 = vmatprep.subr.bf16.mxu0 0
    %2830 = vmatpush1.bf16.msra.mxu0 0
    %2831 = vmatprep.subr.bf16.mxu0 0
    %2832 = vmatpush1.bf16.msra.mxu0 0
    %2833 = vmatprep.subr.bf16.mxu0 0
    %2834 = vmatpush1.bf16.msra.mxu0 0
    %2835 = vmatprep.subr.bf16.mxu0 0
    %2836 = vmatpush1.bf16.msra.mxu0 0
    %2837 = vmatprep.subr.bf16.mxu0 0
    %2838 = vmatpush1.bf16.msra.mxu0 0
    %2839 = vmatprep.subr.bf16.mxu0 0
    %2840 = vmatpush1.bf16.msra.mxu0 0
    %2841 = vmatprep.subr.bf16.mxu0 0
    %2842 = vmatpush1.bf16.msra.mxu0 0
    %2843 = vmatprep.mubr.bf16.mxu0 0
    %2844 = vmatmul.mubr.bf16.gmra.mrb[0].mxu0 %v690
    %v2845 = vpop.f32.mrb[0].mxu0
    %v2846 = vadd.f32 %v2803, %v2845
    %v2847 = vpop.f32.mrb[0].mxu0
    %v2848 = vadd.f32 %v2805, %v2847
    %v2849 = vpop.f32.mrb[0].mxu0
    %v2850 = vadd.f32 %v2807, %v2849
    %v2851 = vpop.f32.mrb[0].mxu0
    %v2852 = vadd.f32 %v2809, %v2851
    %2853 = vdwg.mxu0
    %2854 = vmatprep.subr.bf16.mxu0 0
    %2855 = vmatpush1.bf16.msra.mxu0 %v1954
    %2856 = vmatprep.subr.bf16.mxu0 0
    %2857 = vmatpush1.bf16.msra.mxu0 %v1959
    %2858 = vmatprep.subr.bf16.mxu0 0
    %2859 = vmatpush1.bf16.msra.mxu0 %v1964
    %2860 = vmatprep.subr.bf16.mxu0 0
    %2861 = vmatpush1.bf16.msra.mxu0 %v1969
    %2862 = vmatprep.subr.bf16.mxu0 0
    %2863 = vmatpush1.bf16.msra.mxu0 %v1974
    %2864 = vmatprep.subr.bf16.mxu0 0
    %2865 = vmatpush1.bf16.msra.mxu0 %v1979
    %2866 = vmatprep.subr.bf16.mxu0 0
    %2867 = vmatpush1.bf16.msra.mxu0 %v1984
    %2868 = vmatprep.subr.bf16.mxu0 0
    %2869 = vmatpush1.bf16.msra.mxu0 %v1989
    %2870 = vmatprep.subr.bf16.mxu0 0
    %2871 = vmatpush1.bf16.msra.mxu0 %v1994
    %2872 = vmatprep.subr.bf16.mxu0 0
    %2873 = vmatpush1.bf16.msra.mxu0 %v1999
    %2874 = vmatprep.subr.bf16.mxu0 0
    %2875 = vmatpush1.bf16.msra.mxu0 %v2004
    %2876 = vmatprep.subr.bf16.mxu0 0
    %2877 = vmatpush1.bf16.msra.mxu0 %v2009
    %2878 = vmatprep.subr.bf16.mxu0 0
    %2879 = vmatpush1.bf16.msra.mxu0 %v2014
    %2880 = vmatprep.subr.bf16.mxu0 0
    %2881 = vmatpush1.bf16.msra.mxu0 %v2019
    %2882 = vmatprep.subr.bf16.mxu0 0
    %2883 = vmatpush1.bf16.msra.mxu0 %v2024
    %2884 = vmatprep.subr.bf16.mxu0 0
    %2885 = vmatpush1.bf16.msra.mxu0 %v2029
    %2886 = vmatprep.mubr.bf16.mxu0 %v685
    %2887 = vmatmul.mubr.bf16.gmra.mrb[0].mxu0 %v684
    %v2888 = vpop.f32.mrb[0].mxu0
    %v2889 = vadd.f32 %v1048, %v2888
    %v2890 = vpop.f32.mrb[0].mxu0
    %v2891 = vpop.f32.mrb[0].mxu0
    %v2892 = vadd.f32 %v1048, %v2891
    %v2893 = vpop.f32.mrb[0].mxu0
    %2894 = vdwg.mxu0
    %2895 = vmatprep.subr.bf16.mxu0 0
    %2896 = vmatpush1.bf16.msra.mxu0 %v2034
    %2897 = vmatprep.subr.bf16.mxu0 0
    %2898 = vmatpush1.bf16.msra.mxu0 %v2039
    %2899 = vmatprep.subr.bf16.mxu0 0
    %2900 = vmatpush1.bf16.msra.mxu0 %v2044
    %2901 = vmatprep.subr.bf16.mxu0 0
    %2902 = vmatpush1.bf16.msra.mxu0 %v2049
    %2903 = vmatprep.subr.bf16.mxu0 0
    %2904 = vmatpush1.bf16.msra.mxu0 %v2054
    %2905 = vmatprep.subr.bf16.mxu0 0
    %2906 = vmatpush1.bf16.msra.mxu0 %v2059
    %2907 = vmatprep.subr.bf16.mxu0 0
    %2908 = vmatpush1.bf16.msra.mxu0 %v2064
    %2909 = vmatprep.subr.bf16.mxu0 0
    %2910 = vmatpush1.bf16.msra.mxu0 %v2069
    %2911 = vmatprep.subr.bf16.mxu0 0
    %2912 = vmatpush1.bf16.msra.mxu0 %v2074
    %2913 = vmatprep.subr.bf16.mxu0 0
    %2914 = vmatpush1.bf16.msra.mxu0 %v2079
    %2915 = vmatprep.subr.bf16.mxu0 0
    %2916 = vmatpush1.bf16.msra.mxu0 %v2084
    %2917 = vmatprep.subr.bf16.mxu0 0
    %2918 = vmatpush1.bf16.msra.mxu0 %v2089
    %2919 = vmatprep.subr.bf16.mxu0 0
    %2920 = vmatpush1.bf16.msra.mxu0 %v2094
    %2921 = vmatprep.subr.bf16.mxu0 0
    %2922 = vmatpush1.bf16.msra.mxu0 %v2099
    %2923 = vmatprep.subr.bf16.mxu0 0
    %2924 = vmatpush1.bf16.msra.mxu0 %v2104
    %2925 = vmatprep.subr.bf16.mxu0 0
    %2926 = vmatpush1.bf16.msra.mxu0 %v2109
    %2927 = vmatprep.mubr.bf16.mxu0 %v687
    %2928 = vmatmul.mubr.bf16.gmra.mrb[0].mxu0 %v686
    %v2929 = vpop.f32.mrb[0].mxu0
    %v2930 = vadd.f32 %v2889, %v2929
    %v2931 = vpop.f32.mrb[0].mxu0
    %v2932 = vpop.f32.mrb[0].mxu0
    %v2933 = vadd.f32 %v2892, %v2932
    %v2934 = vpop.f32.mrb[0].mxu0
    %2935 = vdwg.mxu0
    %2936 = vmatprep.subr.bf16.mxu0 0
    %2937 = vmatpush1.bf16.msra.mxu0 %v2114
    %2938 = vmatprep.subr.bf16.mxu0 0
    %2939 = vmatpush1.bf16.msra.mxu0 %v2119
    %2940 = vmatprep.subr.bf16.mxu0 0
    %2941 = vmatpush1.bf16.msra.mxu0 %v2124
    %2942 = vmatprep.subr.bf16.mxu0 0
    %2943 = vmatpush1.bf16.msra.mxu0 %v2129
    %2944 = vmatprep.subr.bf16.mxu0 0
    %2945 = vmatpush1.bf16.msra.mxu0 %v2134
    %2946 = vmatprep.subr.bf16.mxu0 0
    %2947 = vmatpush1.bf16.msra.mxu0 %v2139
    %2948 = vmatprep.subr.bf16.mxu0 0
    %2949 = vmatpush1.bf16.msra.mxu0 %v2144
    %2950 = vmatprep.subr.bf16.mxu0 0
    %2951 = vmatpush1.bf16.msra.mxu0 %v2149
    %2952 = vmatprep.subr.bf16.mxu0 0
    %2953 = vmatpush1.bf16.msra.mxu0 %v2154
    %2954 = vmatprep.subr.bf16.mxu0 0
    %2955 = vmatpush1.bf16.msra.mxu0 %v2159
    %2956 = vmatprep.subr.bf16.mxu0 0
    %2957 = vmatpush1.bf16.msra.mxu0 %v2164
    %2958 = vmatprep.subr.bf16.mxu0 0
    %2959 = vmatpush1.bf16.msra.mxu0 %v2169
    %2960 = vmatprep.subr.bf16.mxu0 0
    %2961 = vmatpush1.bf16.msra.mxu0 %v2174
    %2962 = vmatprep.subr.bf16.mxu0 0
    %2963 = vmatpush1.bf16.msra.mxu0 %v2179
    %2964 = vmatprep.subr.bf16.mxu0 0
    %2965 = vmatpush1.bf16.msra.mxu0 %v2184
    %2966 = vmatprep.subr.bf16.mxu0 0
    %2967 = vmatpush1.bf16.msra.mxu0 %v2189
    %2968 = vmatprep.mubr.bf16.mxu0 %v689
    %2969 = vmatmul.mubr.bf16.gmra.mrb[0].mxu0 %v688
    %v2970 = vpop.f32.mrb[0].mxu0
    %v2971 = vadd.f32 %v2930, %v2970
    %v2972 = vpop.f32.mrb[0].mxu0
    %v2973 = vpop.f32.mrb[0].mxu0
    %v2974 = vadd.f32 %v2933, %v2973
    %v2975 = vpop.f32.mrb[0].mxu0
    %2976 = vdwg.mxu0
    %2977 = vmatprep.subr.bf16.mxu0 0
    %2978 = vmatpush1.bf16.msra.mxu0 %v2194
    %2979 = vmatprep.subr.bf16.mxu0 0
    %2980 = vmatpush1.bf16.msra.mxu0 %v2199
    %2981 = vmatprep.subr.bf16.mxu0 0
    %2982 = vmatpush1.bf16.msra.mxu0 %v2204
    %2983 = vmatprep.subr.bf16.mxu0 0
    %2984 = vmatpush1.bf16.msra.mxu0 %v2209
    %2985 = vmatprep.subr.bf16.mxu0 0
    %2986 = vmatpush1.bf16.msra.mxu0 %v2214
    %2987 = vmatprep.subr.bf16.mxu0 0
    %2988 = vmatpush1.bf16.msra.mxu0 %v2219
    %2989 = vmatprep.subr.bf16.mxu0 0
    %2990 = vmatpush1.bf16.msra.mxu0 %v2224
    %2991 = vmatprep.subr.bf16.mxu0 0
    %2992 = vmatpush1.bf16.msra.mxu0 %v2229
    %2993 = vmatprep.subr.bf16.mxu0 0
    %2994 = vmatpush1.bf16.msra.mxu0 0
    %2995 = vmatprep.subr.bf16.mxu0 0
    %2996 = vmatpush1.bf16.msra.mxu0 0
    %2997 = vmatprep.subr.bf16.mxu0 0
    %2998 = vmatpush1.bf16.msra.mxu0 0
    %2999 = vmatprep.subr.bf16.mxu0 0
    %3000 = vmatpush1.bf16.msra.mxu0 0
    %3001 = vmatprep.subr.bf16.mxu0 0
    %3002 = vmatpush1.bf16.msra.mxu0 0
    %3003 = vmatprep.subr.bf16.mxu0 0
    %3004 = vmatpush1.bf16.msra.mxu0 0
    %3005 = vmatprep.subr.bf16.mxu0 0
    %3006 = vmatpush1.bf16.msra.mxu0 0
    %3007 = vmatprep.subr.bf16.mxu0 0
    %3008 = vmatpush1.bf16.msra.mxu0 0
    %3009 = vmatprep.mubr.bf16.mxu0 0
    %3010 = vmatmul.mubr.bf16.gmra.mrb[0].mxu0 %v690
    %v3011 = vpop.f32.mrb[0].mxu0
    %v3012 = vadd.f32 %v2971, %v3011
    %v3013 = vpop.f32.mrb[0].mxu0
    %v3014 = vpop.f32.mrb[0].mxu0
    %v3015 = vadd.f32 %v2974, %v3014
    %v3016 = vpop.f32.mrb[0].mxu0
    %3017 = vdwg.mxu0
    %v3018 = vmax.f32 %v2674, 0.0
    %v3019 = vmax.f32 %v2676, 0.0
    %v3020 = vmax.f32 %v2846, 0.0
    %v3021 = vmax.f32 %v2848, 0.0
    %v3022 = vmax.f32 %v3012, 0.0
    %v3023 = vmax.f32 %v2678, 0.0
    %v3024 = vmax.f32 %v2680, 0.0
    %v3025 = vmax.f32 %v2850, 0.0
    %v3026 = vmax.f32 %v2852, 0.0
    %v3027 = vmax.f32 %v3015, 0.0
    %v3028 = vpack.c.bf16 %v3023, %v3018
    %v3029 = vpack.c.bf16 %v3024, %v3019
    %v3030 = vpack.c.bf16 %v3025, %v3020
    %v3031 = vpack.c.bf16 %v3026, %v3021
    %v3032 = vpack.c.bf16 %v3027, %v3022
    %v3033 = vld [vmem:[#allocation9] sm:$0xf]
    %v3034 = vld [vmem:[#allocation9 + $0x4] sm:$0xf]
    %v3035 = vld [vmem:[#allocation9 + $0x8] sm:$0xf]
    %v3036 = vld [vmem:[#allocation9 + $0xc] sm:$0xf]
    %v3037 = vld [vmem:[#allocation9 + $0x10] sm:$0xf]
    %v3038 = vld [vmem:[#allocation9 + $0x14] sm:$0xf]
    %v3039 = vld [vmem:[#allocation9 + $0x18] sm:$0xf]
    %v3040 = vld [vmem:[#allocation9 + $0x1c] sm:$0xf]
    %v3041 = vld [vmem:[#allocation9 + $0x20] sm:$0xf]
    %v3042 = vld [vmem:[#allocation9 + $0x24] sm:$0xf]
    %v3043 = vld [vmem:[#allocation9 + $0x28] sm:$0xf]
    %v3044 = vld [vmem:[#allocation9 + $0x2c] sm:$0xf]
    %v3045 = vld [vmem:[#allocation9 + $0x30] sm:$0xf]
    %v3046 = vld [vmem:[#allocation9 + $0x34] sm:$0xf]
    %v3047 = vld [vmem:[#allocation9 + $0x38] sm:$0xf]
    %v3048 = vld [vmem:[#allocation9 + $0x3c] sm:$0xf]
    %v3049 = vld [vmem:[#allocation9 + $0x40] sm:$0xf]
    %v3050 = vld [vmem:[#allocation9 + $0x44] sm:$0xf]
    %v3051 = vld [vmem:[#allocation9 + $0x48] sm:$0xf]
    %v3052 = vld [vmem:[#allocation9 + $0x4c] sm:$0xf]
    %v3053 = vld [vmem:[#allocation9 + $0x50] sm:$0xf]
    %v3054 = vld [vmem:[#allocation9 + $0x54] sm:$0xf]
    %v3055 = vld [vmem:[#allocation9 + $0x58] sm:$0xf]
    %v3056 = vld [vmem:[#allocation9 + $0x5c] sm:$0xf]
    %v3057 = vld [vmem:[#allocation9 + $0x60] sm:$0xf]
    %v3058 = vld [vmem:[#allocation9 + $0x64] sm:$0xf]
    %v3059 = vld [vmem:[#allocation9 + $0x68] sm:$0xf]
    %v3060 = vld [vmem:[#allocation9 + $0x6c] sm:$0xf]
    %v3061 = vld [vmem:[#allocation9 + $0x70] sm:$0xf]
    %v3062 = vld [vmem:[#allocation9 + $0x74] sm:$0xf]
    %v3063 = vld [vmem:[#allocation9 + $0x78] sm:$0xf]
    %v3064 = vld [vmem:[#allocation9 + $0x7c] sm:$0xf]
    %v3065 = vld [vmem:[#allocation9 + $0x80] sm:$0xf]
    %v3066 = vld [vmem:[#allocation9 + $0x84] sm:$0xf]
    %v3067 = vld [vmem:[#allocation9 + $0x88] sm:$0xf]
    %v3068 = vld [vmem:[#allocation9 + $0x8c] sm:$0xf]
    %v3069 = vld [vmem:[#allocation9 + $0x90] sm:$0xf]
    %v3070 = vld [vmem:[#allocation9 + $0x94] sm:$0xf]
    %v3071 = vld [vmem:[#allocation9 + $0x98] sm:$0xf]
    %v3072 = vld [vmem:[#allocation9 + $0x9c] sm:$0xf]
    %v3073 = vld [vmem:[#allocation9 + $0xa0] sm:$0xf]
    %v3074 = vld [vmem:[#allocation9 + $0xa4] sm:$0xf]
    %v3075 = vld [vmem:[#allocation9 + $0xa8] sm:$0xf]
    %v3076 = vld [vmem:[#allocation9 + $0xac] sm:$0xf]
    %v3077 = vld [vmem:[#allocation9 + $0xb0] sm:$0xf]
    %v3078 = vld [vmem:[#allocation9 + $0xb4] sm:$0xf]
    %v3079 = vld [vmem:[#allocation9 + $0xb8] sm:$0xf]
    %v3080 = vld [vmem:[#allocation9 + $0xbc] sm:$0xf]
    %v3081 = vld [vmem:[#allocation9 + $0xc0] sm:$0xf]
    %v3082 = vld [vmem:[#allocation9 + $0xc4] sm:$0xf]
    %v3083 = vld [vmem:[#allocation9 + $0xc8] sm:$0xf]
    %v3084 = vld [vmem:[#allocation9 + $0xcc] sm:$0xf]
    %v3085 = vld [vmem:[#allocation9 + $0xd0] sm:$0xf]
    %v3086 = vld [vmem:[#allocation9 + $0xd4] sm:$0xf]
    %v3087 = vld [vmem:[#allocation9 + $0xd8] sm:$0xf]
    %v3088 = vld [vmem:[#allocation9 + $0xdc] sm:$0xf]
    %v3089 = vld [vmem:[#allocation9 + $0xe0] sm:$0xf]
    %v3090 = vld [vmem:[#allocation9 + $0xe4] sm:$0xf]
    %v3091 = vld [vmem:[#allocation9 + $0xe8] sm:$0xf]
    %v3092 = vld [vmem:[#allocation9 + $0xec] sm:$0xf]
    %v3093 = vld [vmem:[#allocation9 + $0xf0] sm:$0xf]
    %v3094 = vld [vmem:[#allocation9 + $0xf4] sm:$0xf]
    %v3095 = vld [vmem:[#allocation9 + $0xf8] sm:$0xf]
    %v3096 = vld [vmem:[#allocation9 + $0xfc] sm:$0xf]
    %v3097 = vld [vmem:[#allocation9 + $0x100] sm:$0xf]
    %v3098 = vld [vmem:[#allocation9 + $0x104] sm:$0xf]
    %v3099 = vld [vmem:[#allocation9 + $0x108] sm:$0xf]
    %v3100 = vld [vmem:[#allocation9 + $0x10c] sm:$0xf]
    %v3101 = vld [vmem:[#allocation9 + $0x110] sm:$0xf]
    %v3102 = vld [vmem:[#allocation9 + $0x114] sm:$0xf]
    %v3103 = vld [vmem:[#allocation9 + $0x118] sm:$0xf]
    %v3104 = vld [vmem:[#allocation9 + $0x11c] sm:$0xf]
    %v3105 = vld [vmem:[#allocation9 + $0x120] sm:$0xf]
    %v3106 = vld [vmem:[#allocation9 + $0x124] sm:$0xf]
    %v3107 = vld [vmem:[#allocation9 + $0x128] sm:$0xf]
    %v3108 = vld [vmem:[#allocation9 + $0x12c] sm:$0xf]
    %v3109 = vld [vmem:[#allocation9 + $0x130] sm:$0xf]
    %v3110 = vld [vmem:[#allocation9 + $0x134] sm:$0xf]
    %v3111 = vld [vmem:[#allocation9 + $0x138] sm:$0xf]
    %v3112 = vld [vmem:[#allocation9 + $0x13c] sm:$0xf]
    %v3113 = vld [vmem:[#allocation10] sm:$0x1]
    %v3115 = vlaneseq
    %v3116 = vshrl.u32 %v3115, 7
    %v3117 = vsub.s32 0, %v3116
    %v3118 = vrot.slane %v3113, %v3117
    %v3200 = vunpack.c.l.b16 %v3033
    %v3201 = vunpack.c.l.b16 %v3034
    %v3202 = vunpack.c.l.b16 %v3035
    %v3203 = vunpack.c.l.b16 %v3036
    %v3204 = vunpack.c.l.b16 %v3037
    %v3205 = vunpack.c.l.b16 %v3038
    %v3206 = vunpack.c.l.b16 %v3039
    %v3207 = vunpack.c.l.b16 %v3040
    %v3208 = vunpack.c.l.b16 %v3041
    %v3209 = vunpack.c.l.b16 %v3042
    %v3210 = vunpack.c.l.b16 %v3043
    %v3211 = vunpack.c.l.b16 %v3044
    %v3212 = vunpack.c.l.b16 %v3045
    %v3213 = vunpack.c.l.b16 %v3046
    %v3214 = vunpack.c.l.b16 %v3047
    %v3215 = vunpack.c.l.b16 %v3048
    %v3216 = vunpack.c.l.b16 %v3049
    %v3217 = vunpack.c.l.b16 %v3050
    %v3218 = vunpack.c.l.b16 %v3051
    %v3219 = vunpack.c.l.b16 %v3052
    %v3220 = vunpack.c.l.b16 %v3053
    %v3221 = vunpack.c.l.b16 %v3054
    %v3222 = vunpack.c.l.b16 %v3055
    %v3223 = vunpack.c.l.b16 %v3056
    %v3224 = vunpack.c.l.b16 %v3057
    %v3225 = vunpack.c.l.b16 %v3058
    %v3226 = vunpack.c.l.b16 %v3059
    %v3227 = vunpack.c.l.b16 %v3060
    %v3228 = vunpack.c.l.b16 %v3061
    %v3229 = vunpack.c.l.b16 %v3062
    %v3230 = vunpack.c.l.b16 %v3063
    %v3231 = vunpack.c.l.b16 %v3064
    %v3232 = vunpack.c.l.b16 %v3065
    %v3233 = vunpack.c.l.b16 %v3066
    %v3234 = vunpack.c.l.b16 %v3067
    %v3235 = vunpack.c.l.b16 %v3068
    %v3236 = vunpack.c.l.b16 %v3069
    %v3237 = vunpack.c.l.b16 %v3070
    %v3238 = vunpack.c.l.b16 %v3071
    %v3239 = vunpack.c.l.b16 %v3072
    %v3240 = vunpack.c.l.b16 %v3073
    %v3241 = vunpack.c.l.b16 %v3074
    %v3242 = vunpack.c.l.b16 %v3075
    %v3243 = vunpack.c.l.b16 %v3076
    %v3244 = vunpack.c.l.b16 %v3077
    %v3245 = vunpack.c.l.b16 %v3078
    %v3246 = vunpack.c.l.b16 %v3079
    %v3247 = vunpack.c.l.b16 %v3080
    %v3248 = vunpack.c.l.b16 %v3081
    %v3249 = vunpack.c.l.b16 %v3082
    %v3250 = vunpack.c.l.b16 %v3083
    %v3251 = vunpack.c.l.b16 %v3084
    %v3252 = vunpack.c.l.b16 %v3085
    %v3253 = vunpack.c.l.b16 %v3086
    %v3254 = vunpack.c.l.b16 %v3087
    %v3255 = vunpack.c.l.b16 %v3088
    %v3256 = vunpack.c.l.b16 %v3089
    %v3257 = vunpack.c.l.b16 %v3090
    %v3258 = vunpack.c.l.b16 %v3091
    %v3259 = vunpack.c.l.b16 %v3092
    %v3260 = vunpack.c.l.b16 %v3093
    %v3261 = vunpack.c.l.b16 %v3094
    %v3262 = vunpack.c.l.b16 %v3095
    %v3263 = vunpack.c.l.b16 %v3096
    %v3264 = vunpack.c.l.b16 %v3097
    %v3265 = vunpack.c.l.b16 %v3098
    %v3266 = vunpack.c.l.b16 %v3099
    %v3267 = vunpack.c.l.b16 %v3100
    %v3268 = vunpack.c.l.b16 %v3101
    %v3269 = vunpack.c.l.b16 %v3102
    %v3270 = vunpack.c.l.b16 %v3103
    %v3271 = vunpack.c.l.b16 %v3104
    %v3272 = vunpack.c.l.b16 %v3105
    %v3273 = vunpack.c.l.b16 %v3106
    %v3274 = vunpack.c.l.b16 %v3107
    %v3275 = vunpack.c.l.b16 %v3108
    %v3276 = vunpack.c.l.b16 %v3109
    %v3277 = vunpack.c.l.b16 %v3110
    %v3278 = vunpack.c.l.b16 %v3111
    %v3279 = vunpack.c.l.b16 %v3112
    %v3280 = vpack.c.b16 %v3201, %v3200
    %v3281 = vpack.c.b16 %v3203, %v3202
    %v3282 = vpack.c.b16 %v3205, %v3204
    %v3283 = vpack.c.b16 %v3207, %v3206
    %v3284 = vpack.c.b16 %v3209, %v3208
    %v3285 = vpack.c.b16 %v3211, %v3210
    %v3286 = vpack.c.b16 %v3213, %v3212
    %v3287 = vpack.c.b16 %v3215, %v3214
    %v3288 = vpack.c.b16 %v3217, %v3216
    %v3289 = vpack.c.b16 %v3219, %v3218
    %v3290 = vpack.c.b16 %v3221, %v3220
    %v3291 = vpack.c.b16 %v3223, %v3222
    %v3292 = vpack.c.b16 %v3225, %v3224
    %v3293 = vpack.c.b16 %v3227, %v3226
    %v3294 = vpack.c.b16 %v3229, %v3228
    %v3295 = vpack.c.b16 %v3231, %v3230
    %v3296 = vpack.c.b16 %v3233, %v3232
    %v3297 = vpack.c.b16 %v3235, %v3234
    %v3298 = vpack.c.b16 %v3237, %v3236
    %v3299 = vpack.c.b16 %v3239, %v3238
    %v3300 = vpack.c.b16 %v3241, %v3240
    %v3301 = vpack.c.b16 %v3243, %v3242
    %v3302 = vpack.c.b16 %v3245, %v3244
    %v3303 = vpack.c.b16 %v3247, %v3246
    %v3304 = vpack.c.b16 %v3249, %v3248
    %v3305 = vpack.c.b16 %v3251, %v3250
    %v3306 = vpack.c.b16 %v3253, %v3252
    %v3307 = vpack.c.b16 %v3255, %v3254
    %v3308 = vpack.c.b16 %v3257, %v3256
    %v3309 = vpack.c.b16 %v3259, %v3258
    %v3310 = vpack.c.b16 %v3261, %v3260
    %v3311 = vpack.c.b16 %v3263, %v3262
    %v3312 = vpack.c.b16 %v3265, %v3264
    %v3313 = vpack.c.b16 %v3267, %v3266
    %v3314 = vpack.c.b16 %v3269, %v3268
    %v3315 = vpack.c.b16 %v3271, %v3270
    %v3316 = vpack.c.b16 %v3273, %v3272
    %v3317 = vpack.c.b16 %v3275, %v3274
    %v3318 = vpack.c.b16 %v3277, %v3276
    %v3319 = vpack.c.b16 %v3279, %v3278
    %3360 = vmatprep.subr.bf16.mxu0 0
    %3361 = vmatpush1.bf16.msra.mxu0 %v3280
    %3362 = vmatprep.subr.bf16.mxu0 0
    %3363 = vmatpush1.bf16.msra.mxu0 %v3281
    %3364 = vmatprep.subr.bf16.mxu0 0
    %3365 = vmatpush1.bf16.msra.mxu0 %v3282
    %3366 = vmatprep.subr.bf16.mxu0 0
    %3367 = vmatpush1.bf16.msra.mxu0 %v3283
    %3368 = vmatprep.subr.bf16.mxu0 0
    %3369 = vmatpush1.bf16.msra.mxu0 %v3284
    %3370 = vmatprep.subr.bf16.mxu0 0
    %3371 = vmatpush1.bf16.msra.mxu0 %v3285
    %3372 = vmatprep.subr.bf16.mxu0 0
    %3373 = vmatpush1.bf16.msra.mxu0 %v3286
    %3374 = vmatprep.subr.bf16.mxu0 0
    %3375 = vmatpush1.bf16.msra.mxu0 %v3287
    %3376 = vmatprep.subr.bf16.mxu0 0
    %3377 = vmatpush1.bf16.msra.mxu0 %v3288
    %3378 = vmatprep.subr.bf16.mxu0 0
    %3379 = vmatpush1.bf16.msra.mxu0 %v3289
    %3380 = vmatprep.subr.bf16.mxu0 0
    %3381 = vmatpush1.bf16.msra.mxu0 %v3290
    %3382 = vmatprep.subr.bf16.mxu0 0
    %3383 = vmatpush1.bf16.msra.mxu0 %v3291
    %3384 = vmatprep.subr.bf16.mxu0 0
    %3385 = vmatpush1.bf16.msra.mxu0 %v3292
    %3386 = vmatprep.subr.bf16.mxu0 0
    %3387 = vmatpush1.bf16.msra.mxu0 %v3293
    %3388 = vmatprep.subr.bf16.mxu0 0
    %3389 = vmatpush1.bf16.msra.mxu0 %v3294
    %3390 = vmatprep.subr.bf16.mxu0 0
    %3391 = vmatpush1.bf16.msra.mxu0 %v3295
    %3392 = vmatprep.mubr.bf16.mxu0 %v3029
    %3393 = vmatmul.mubr.bf16.gmra.mrb[0].mxu0 %v3028
    %v3394 = vpop.f32.mrb[0].mxu0
    %v3395 = vadd.f32 %v3118, %v3394
    %v3396 = vpop.f32.mrb[0].mxu0
    %v3397 = vpop.f32.mrb[0].mxu0
    %v3398 = vadd.f32 %v3118, %v3397
    %v3399 = vpop.f32.mrb[0].mxu0
    %3400 = vdwg.mxu0
    %3401 = vmatprep.subr.bf16.mxu0 0
    %3402 = vmatpush1.bf16.msra.mxu0 %v3296
    %3403 = vmatprep.subr.bf16.mxu0 0
    %3404 = vmatpush1.bf16.msra.mxu0 %v3297
    %3405 = vmatprep.subr.bf16.mxu0 0
    %3406 = vmatpush1.bf16.msra.mxu0 %v3298
    %3407 = vmatprep.subr.bf16.mxu0 0
    %3408 = vmatpush1.bf16.msra.mxu0 %v3299
    %3409 = vmatprep.subr.bf16.mxu0 0
    %3410 = vmatpush1.bf16.msra.mxu0 %v3300
    %3411 = vmatprep.subr.bf16.mxu0 0
    %3412 = vmatpush1.bf16.msra.mxu0 %v3301
    %3413 = vmatprep.subr.bf16.mxu0 0
    %3414 = vmatpush1.bf16.msra.mxu0 %v3302
    %3415 = vmatprep.subr.bf16.mxu0 0
    %3416 = vmatpush1.bf16.msra.mxu0 %v3303
    %3417 = vmatprep.subr.bf16.mxu0 0
    %3418 = vmatpush1.bf16.msra.mxu0 %v3304
    %3419 = vmatprep.subr.bf16.mxu0 0
    %3420 = vmatpush1.bf16.msra.mxu0 %v3305
    %3421 = vmatprep.subr.bf16.mxu0 0
    %3422 = vmatpush1.bf16.msra.mxu0 %v3306
    %3423 = vmatprep.subr.bf16.mxu0 0
    %3424 = vmatpush1.bf16.msra.mxu0 %v3307
    %3425 = vmatprep.subr.bf16.mxu0 0
    %3426 = vmatpush1.bf16.msra.mxu0 %v3308
    %3427 = vmatprep.subr.bf16.mxu0 0
    %3428 = vmatpush1.bf16.msra.mxu0 %v3309
    %3429 = vmatprep.subr.bf16.mxu0 0
    %3430 = vmatpush1.bf16.msra.mxu0 %v3310
    %3431 = vmatprep.subr.bf16.mxu0 0
    %3432 = vmatpush1.bf16.msra.mxu0 %v3311
    %3433 = vmatprep.mubr.bf16.mxu0 %v3031
    %3434 = vmatmul.mubr.bf16.gmra.mrb[0].mxu0 %v3030
    %v3435 = vpop.f32.mrb[0].mxu0
    %v3436 = vadd.f32 %v3395, %v3435
    %v3437 = vpop.f32.mrb[0].mxu0
    %v3438 = vpop.f32.mrb[0].mxu0
    %v3439 = vadd.f32 %v3398, %v3438
    %v3440 = vpop.f32.mrb[0].mxu0
    %3441 = vdwg.mxu0
    %3442 = vmatprep.subr.bf16.mxu0 0
    %3443 = vmatpush1.bf16.msra.mxu0 %v3312
    %3444 = vmatprep.subr.bf16.mxu0 0
    %3445 = vmatpush1.bf16.msra.mxu0 %v3313
    %3446 = vmatprep.subr.bf16.mxu0 0
    %3447 = vmatpush1.bf16.msra.mxu0 %v3314
    %3448 = vmatprep.subr.bf16.mxu0 0
    %3449 = vmatpush1.bf16.msra.mxu0 %v3315
    %3450 = vmatprep.subr.bf16.mxu0 0
    %3451 = vmatpush1.bf16.msra.mxu0 %v3316
    %3452 = vmatprep.subr.bf16.mxu0 0
    %3453 = vmatpush1.bf16.msra.mxu0 %v3317
    %3454 = vmatprep.subr.bf16.mxu0 0
    %3455 = vmatpush1.bf16.msra.mxu0 %v3318
    %3456 = vmatprep.subr.bf16.mxu0 0
    %3457 = vmatpush1.bf16.msra.mxu0 %v3319
    %3458 = vmatprep.subr.bf16.mxu0 0
    %3459 = vmatpush1.bf16.msra.mxu0 0
    %3460 = vmatprep.subr.bf16.mxu0 0
    %3461 = vmatpush1.bf16.msra.mxu0 0
    %3462 = vmatprep.subr.bf16.mxu0 0
    %3463 = vmatpush1.bf16.msra.mxu0 0
    %3464 = vmatprep.subr.bf16.mxu0 0
    %3465 = vmatpush1.bf16.msra.mxu0 0
    %3466 = vmatprep.subr.bf16.mxu0 0
    %3467 = vmatpush1.bf16.msra.mxu0 0
    %3468 = vmatprep.subr.bf16.mxu0 0
    %3469 = vmatpush1.bf16.msra.mxu0 0
    %3470 = vmatprep.subr.bf16.mxu0 0
    %3471 = vmatpush1.bf16.msra.mxu0 0
    %3472 = vmatprep.subr.bf16.mxu0 0
    %3473 = vmatpush1.bf16.msra.mxu0 0
    %3474 = vmatprep.mubr.bf16.mxu0 0
    %3475 = vmatmul.mubr.bf16.gmra.mrb[0].mxu0 %v3032
    %v3476 = vpop.f32.mrb[0].mxu0
    %v3477 = vadd.f32 %v3436, %v3476
    %v3478 = vpop.f32.mrb[0].mxu0
    %v3479 = vpop.f32.mrb[0].mxu0
    %v3480 = vadd.f32 %v3439, %v3479
    %v3481 = vpop.f32.mrb[0].mxu0
    %3482 = vdwg.mxu0
    %v3483 = vtanh.pop %v3477
    %v3484 = vtanh.pop %v3480
    %v3485 = vpack.c.bf16 %v3484, %v3483
    %v3487 = vunpack.c.l.b16 %v3485
    %v3488 = vunpack.c.h.b16 %v3485
    %v3489 = vpack.c.b16 %v3487, %v3487
    %v3490 = vpack.c.b16 %v3488, %v3488
    %3493 = vst [vmem:[%s7] sm:$0xf] %v3489
    %3494 = vst [vmem:[%s7 + $0x4] sm:$0xf] %v3490
    // Predicated region
    $region54: #{actor_forward.1} parent=1 // pred_check
      _
    $region55: #{actor_forward.1} parent=1 // pred_check_branch
      %3496 = sbr.rel (0) target = $region57
    $region56: #{actor_forward.1} parent=1 // pred_region
      _
    $region57: #{actor_forward.1} parent=1 // pred_fallthru
      _
    // Predicated region
    $region58: #{actor_forward.1} parent=1 // pred_check
      _
    $region59: #{actor_forward.1} parent=1 // pred_check_branch
      %3498 = sbr.rel (0) target = $region61
    $region60: #{actor_forward.1} parent=1 // pred_region
      _
    $region61: #{actor_forward.1} parent=1 // pred_fallthru
      _
    %3499 = vsyncpa [#allocation3], 1
    %3500 = vsyncpa [#allocation5], 1
    %3501 = vsyncpa [#allocation8], 1
    %3502 = vsyncpa [#allocation11], 1

</llo_original>
